<compile_context>
chip_gen: v5e
topology: v5e:2x2
jax: 0.10.0
libtpu: 0.0.40
codegen_flags: <defaults>
</compile_context>

<pallas_src>
import numpy as np
import jax
import jax.numpy as jnp
from jax.experimental import pallas as pl
from jax.experimental.pallas import tpu as pltpu

LANE = 128  # TPU lane width; feature/output axes are padded to this for dense vst.


# ----------------------------------------------------------------------------
# MADE mask construction (exact replica of the PyTorch _build_masks, numpy only)
# ----------------------------------------------------------------------------
def build_made_masks(num_input, num_output, num_hidden, num_layers=3):
    rng = np.random.RandomState(0)
    m = [np.arange(1, num_input + 1)]
    masks = []
    for i in range(1, num_layers + 1):
        if i == num_layers:
            base = np.arange(1, num_input + 1)
            assert num_output % num_input == 0
            m.append(np.hstack([base for _ in range(num_output // num_input)]))
        else:
            m.append(rng.randint(1, num_input, size=num_hidden))
        if i == num_layers:
            mask = m[i][None, :] > m[i - 1][:, None]
        else:
            mask = m[i][None, :] >= m[i - 1][:, None]
        # torch stores mask.astype(float32).T, shape == (out_features, in_features)
        masks.append(mask.astype(np.float32).T)
    return masks


# ----------------------------------------------------------------------------
# Pallas kernel: full IAF forward pass (fused MADE 3-layer masked MLP + gating)
# ----------------------------------------------------------------------------
def iaf_kernel(xc_ref, w0_ref, b0_ref, w1_ref, b1_ref,
               w2m_ref, b2m_ref, w2s_ref, b2s_ref,
               z_ref, nls_ref):
    xc = xc_ref[...]                                    # (Bt, LANE) = [x | ctx | 0]

    # layer 0: fused masked-linear + context-linear (single MXU matmul), ReLU
    h = jnp.dot(xc, w0_ref[...], preferred_element_type=jnp.float32) + b0_ref[...]
    h = jnp.maximum(h, 0.0)

    # layer 1: masked linear, ReLU
    h = jnp.dot(h, w1_ref[...], preferred_element_type=jnp.float32) + b1_ref[...]
    h = jnp.maximum(h, 0.0)

    # layer 2: split m / s heads -> straight (Bt, LANE) results, no lane slicing.
    # sigmoid_arg_bias is pre-folded into b2s.
    m = jnp.dot(h, w2m_ref[...], preferred_element_type=jnp.float32) + b2m_ref[...]
    s = jnp.dot(h, w2s_ref[...], preferred_element_type=jnp.float32) + b2s_ref[...]

    sig = jax.nn.sigmoid(s)
    # valid only on the first D lanes (xc carries ctx / zeros beyond); sliced outside.
    z_ref[...] = sig * xc + (1.0 - sig) * m
    # -log_sigmoid(s) = softplus(-s), numerically stable form
    nls_ref[...] = jnp.logaddexp(0.0, -s)


def iaf_forward(x, ctx, params, *, batch_tile=128):
    B, D = x.shape
    C = ctx.shape[1]
    H = params["w0c"].shape[1]
    assert D + C <= LANE
    assert B % batch_tile == 0

    # Pack [x | ctx | zeros] into one lane-dense (B, LANE) slab.
    xc = jnp.zeros((B, LANE), jnp.float32)
    xc = xc.at[:, :D].set(x).at[:, D:D + C].set(ctx)

    grid = (B // batch_tile,)
    row_spec = pl.BlockSpec((batch_tile, LANE), lambda i: (i, 0))

    def const(shape):
        return pl.BlockSpec(shape, lambda i, _n=len(shape): (0,) * _n)

    flops = 2 * B * (LANE * H + H * H + 2 * H * LANE)
    bytes_accessed = 4 * (B * LANE                      # xc
                          + LANE * H + H                # w0c, b0
                          + H * H + H                   # w1, b1
                          + 2 * (H * LANE + LANE)       # w2m/b2m, w2s/b2s
                          + 2 * B * LANE)               # z, nls
    cost = pl.CostEstimate(flops=flops,
                           transcendentals=3 * B * LANE,
                           bytes_accessed=bytes_accessed)

    z_pad, nls_pad = pl.pallas_call(
        iaf_kernel,
        out_shape=(jax.ShapeDtypeStruct((B, LANE), jnp.float32),
                   jax.ShapeDtypeStruct((B, LANE), jnp.float32)),
        grid=grid,
        in_specs=[
            row_spec,                    # xc (tiled over batch)
            const((LANE, H)),            # fused [w0; wc] (padded), resident
            const((1, H)),               # b0
            const((H, H)),               # w1
            const((1, H)),               # b1
            const((H, LANE)),            # w2 m-head (lane-padded)
            const((1, LANE)),            # b2 m-head
            const((H, LANE)),            # w2 s-head (lane-padded)
            const((1, LANE)),            # b2 s-head (+ sigmoid_arg_bias folded in)
        ],
        out_specs=(row_spec, row_spec),
        compiler_params=pltpu.CompilerParams(
            dimension_semantics=("parallel",)),          # v7x: 2 TCs split the batch
        cost_estimate=cost,
    )(xc, params["w0c"], params["b0"],
      params["w1"], params["b1"],
      params["w2m"], params["b2m"],
      params["w2s"], params["b2s"])

    return z_pad[:, :D], nls_pad[:, :D]


# ----------------------------------------------------------------------------
# Parameter setup (deterministic), pure-JAX reference, and driver
# ----------------------------------------------------------------------------
def make_params(key, num_input, num_hidden, num_context):
    D, H, C = num_input, num_hidden, num_context
    masks = build_made_masks(D, 2 * D, H)            # [(H,D), (H,H), (2D,H)]

    ks = jax.random.split(key, 6)

    # Torch nn.Linear-style init scale (uniform +-1/sqrt(fan_in)); exact values
    # don't matter (synthetic weights), only shapes/semantics do.
    def u(k, shape, fan_in):
        bound = 1.0 / np.sqrt(fan_in)
        return jax.random.uniform(k, shape, jnp.float32, -bound, bound)

    W0 = u(ks[0], (H, D), D)        # (out, in)
    b0 = u(ks[1], (H,), D)
    Wc = u(ks[2], (H, C), C)        # cond_linear, no bias
    W1 = u(ks[3], (H, H), H)
    b1 = u(ks[4], (H,), H)
    W2 = u(ks[5], (2 * D, H), H)
    b2 = jnp.zeros((2 * D,), jnp.float32)
    sbias = jnp.ones((D,), jnp.float32) * 2.0        # sigmoid_arg_bias

    m0 = jnp.asarray(masks[0]); m1 = jnp.asarray(masks[1]); m2 = jnp.asarray(masks[2])

    w0 = (m0 * W0).T                # (D, H)  pre-masked, pre-transposed
    wc = Wc.T                       # (C, H)
    w1 = (m1 * W1).T                # (H, H)
    w2 = (m2 * W2).T                # (H, 2D)

    # Fused layer-0 weight, lane-padded: rows [0:D] = w0, rows [D:D+C] = wc.
    w0c = jnp.zeros((LANE, H), jnp.float32)
    w0c = w0c.at[:D].set(w0).at[D:D + C].set(wc)

    # Split + lane-pad the output head; fold sigmoid_arg_bias into the s bias.
    w2m = jnp.zeros((H, LANE), jnp.float32).at[:, :D].set(w2[:, :D])
    w2s = jnp.zeros((H, LANE), jnp.float32).at[:, :D].set(w2[:, D:])
    b2m = jnp.zeros((1, LANE), jnp.float32).at[0, :D].set(b2[:D])
    b2s = jnp.zeros((1, LANE), jnp.float32).at[0, :D].set(b2[D:] + sbias)

    kernel_params = {
        "w0c": w0c, "b0": b0.reshape(1, H),
        "w1": w1, "b1": b1.reshape(1, H),
        "w2m": w2m, "b2m": b2m, "w2s": w2s, "b2s": b2s,
    }
    ref_params = {
        "w0": w0, "b0": b0, "wc": wc, "w1": w1, "b1": b1,
        "w2": w2, "b2": b2, "sbias": sbias,
    }
    return kernel_params, ref_params


def iaf_reference(x, ctx, p):
    h = jnp.maximum(x @ p["w0"] + p["b0"] + ctx @ p["wc"], 0.0)
    h = jnp.maximum(h @ p["w1"] + p["b1"], 0.0)
    out = h @ p["w2"] + p["b2"]
    D = x.shape[-1]
    m, s = out[:, :D], out[:, D:] + p["sbias"]
    sig = jax.nn.sigmoid(s)
    z = sig * x + (1.0 - sig) * m
    return z, jnp.logaddexp(0.0, -s)


if __name__ == "__main__":
    num_input, num_hidden, num_context = 8, 32, 8
    batch, batch_tile = 256, 128          # grid=(2,) -> exercises batch tiling

    key = jax.random.PRNGKey(0)
    kx, kc, kp = jax.random.split(key, 3)
    x = jax.random.normal(kx, (batch, num_input), jnp.float32)
    ctx = jax.random.normal(kc, (batch, num_context), jnp.float32)
    params, ref_params = make_params(kp, num_input, num_hidden, num_context)

    z, neg_log_sig = iaf_forward(x, ctx, params, batch_tile=batch_tile)
    jax.block_until_ready((z, neg_log_sig))

    z_ref, nls_ref = iaf_reference(x, ctx, ref_params)
    assert jnp.allclose(z, z_ref, atol=1e-5, rtol=1e-5)
    assert jnp.allclose(neg_log_sig, nls_ref, atol=1e-5, rtol=1e-5)

    print("KERNEL_OK")
</pallas_src>

<mosaic_0001>
module attributes {stable_mosaic.version = 11 : i64} {
  func.func @iaf_kernel(%arg0: i32, %arg1: memref<128x128xf32, #tpu.memory_space<vmem>>, %arg2: memref<128x32xf32, #tpu.memory_space<vmem>>, %arg3: memref<1x32xf32, #tpu.memory_space<vmem>>, %arg4: memref<32x32xf32, #tpu.memory_space<vmem>>, %arg5: memref<1x32xf32, #tpu.memory_space<vmem>>, %arg6: memref<32x128xf32, #tpu.memory_space<vmem>>, %arg7: memref<1x128xf32, #tpu.memory_space<vmem>>, %arg8: memref<32x128xf32, #tpu.memory_space<vmem>>, %arg9: memref<1x128xf32, #tpu.memory_space<vmem>>, %arg10: memref<128x128xf32, #tpu.memory_space<vmem>>, %arg11: memref<128x128xf32, #tpu.memory_space<vmem>>) attributes {dimension_semantics = [#tpu.dimension_semantics<parallel>], iteration_bounds = array<i64: 2>, scalar_prefetch = 0 : i64, scratch_operands = 0 : i64, tpu.core_type = #tpu.core_type<tc>, window_params = [{transform_indices = @transform_0, window_bounds = array<i64: 128, 128>}, {pipeline_mode = #tpu.pipeline_mode<synchronous>, transform_indices = @transform_1, window_bounds = array<i64: 128, 32>}, {pipeline_mode = #tpu.pipeline_mode<synchronous>, transform_indices = @transform_2, window_bounds = array<i64: 1, 32>}, {pipeline_mode = #tpu.pipeline_mode<synchronous>, transform_indices = @transform_3, window_bounds = array<i64: 32, 32>}, {pipeline_mode = #tpu.pipeline_mode<synchronous>, transform_indices = @transform_4, window_bounds = array<i64: 1, 32>}, {pipeline_mode = #tpu.pipeline_mode<synchronous>, transform_indices = @transform_5, window_bounds = array<i64: 32, 128>}, {pipeline_mode = #tpu.pipeline_mode<synchronous>, transform_indices = @transform_6, window_bounds = array<i64: 1, 128>}, {pipeline_mode = #tpu.pipeline_mode<synchronous>, transform_indices = @transform_7, window_bounds = array<i64: 32, 128>}, {pipeline_mode = #tpu.pipeline_mode<synchronous>, transform_indices = @transform_8, window_bounds = array<i64: 1, 128>}, {transform_indices = @transform_9, window_bounds = array<i64: 128, 128>}, {transform_indices = @transform_10, window_bounds = array<i64: 128, 128>}]} {
    %c0 = arith.constant 0 : index
    %c0_0 = arith.constant 0 : index
    %0 = vector.load %arg1[%c0, %c0_0] : memref<128x128xf32, #tpu.memory_space<vmem>>, vector<128x128xf32>
    %c0_1 = arith.constant 0 : index
    %c0_2 = arith.constant 0 : index
    %1 = vector.load %arg2[%c0_1, %c0_2] : memref<128x32xf32, #tpu.memory_space<vmem>>, vector<128x32xf32>
    %cst = arith.constant dense<0.000000e+00> : vector<128x32xf32>
    %2 = tpu.matmul %0, %1, %cst {dimension_numbers = #tpu.dot_dimension_numbers<[1], [0], [0], [1], [0, 0, 1, 1], [], []>} : vector<128x128xf32>, vector<128x32xf32>, vector<128x32xf32> -> vector<128x32xf32>
    %c0_3 = arith.constant 0 : index
    %c0_4 = arith.constant 0 : index
    %3 = vector.load %arg3[%c0_3, %c0_4] : memref<1x32xf32, #tpu.memory_space<vmem>>, vector<1x32xf32>
    %4 = vector.broadcast %3 : vector<1x32xf32> to vector<128x32xf32>
    %5 = arith.addf %2, %4 : vector<128x32xf32>
    %cst_5 = arith.constant 0.000000e+00 : f32
    %6 = vector.broadcast %cst_5 : f32 to vector<128x32xf32>
    %7 = arith.maximumf %5, %6 : vector<128x32xf32>
    %c0_6 = arith.constant 0 : index
    %c0_7 = arith.constant 0 : index
    %8 = vector.load %arg4[%c0_6, %c0_7] : memref<32x32xf32, #tpu.memory_space<vmem>>, vector<32x32xf32>
    %cst_8 = arith.constant dense<0.000000e+00> : vector<128x32xf32>
    %9 = tpu.matmul %7, %8, %cst_8 {dimension_numbers = #tpu.dot_dimension_numbers<[1], [0], [0], [1], [0, 0, 1, 1], [], []>} : vector<128x32xf32>, vector<32x32xf32>, vector<128x32xf32> -> vector<128x32xf32>
    %c0_9 = arith.constant 0 : index
    %c0_10 = arith.constant 0 : index
    %10 = vector.load %arg5[%c0_9, %c0_10] : memref<1x32xf32, #tpu.memory_space<vmem>>, vector<1x32xf32>
    %11 = vector.broadcast %10 : vector<1x32xf32> to vector<128x32xf32>
    %12 = arith.addf %9, %11 : vector<128x32xf32>
    %cst_11 = arith.constant 0.000000e+00 : f32
    %13 = vector.broadcast %cst_11 : f32 to vector<128x32xf32>
    %14 = arith.maximumf %12, %13 : vector<128x32xf32>
    %c0_12 = arith.constant 0 : index
    %c0_13 = arith.constant 0 : index
    %15 = vector.load %arg6[%c0_12, %c0_13] : memref<32x128xf32, #tpu.memory_space<vmem>>, vector<32x128xf32>
    %cst_14 = arith.constant dense<0.000000e+00> : vector<128x128xf32>
    %16 = tpu.matmul %14, %15, %cst_14 {dimension_numbers = #tpu.dot_dimension_numbers<[1], [0], [0], [1], [0, 0, 1, 1], [], []>} : vector<128x32xf32>, vector<32x128xf32>, vector<128x128xf32> -> vector<128x128xf32>
    %c0_15 = arith.constant 0 : index
    %c0_16 = arith.constant 0 : index
    %17 = vector.load %arg7[%c0_15, %c0_16] : memref<1x128xf32, #tpu.memory_space<vmem>>, vector<1x128xf32>
    %18 = vector.broadcast %17 : vector<1x128xf32> to vector<128x128xf32>
    %19 = arith.addf %16, %18 : vector<128x128xf32>
    %c0_17 = arith.constant 0 : index
    %c0_18 = arith.constant 0 : index
    %20 = vector.load %arg8[%c0_17, %c0_18] : memref<32x128xf32, #tpu.memory_space<vmem>>, vector<32x128xf32>
    %cst_19 = arith.constant dense<0.000000e+00> : vector<128x128xf32>
    %21 = tpu.matmul %14, %20, %cst_19 {dimension_numbers = #tpu.dot_dimension_numbers<[1], [0], [0], [1], [0, 0, 1, 1], [], []>} : vector<128x32xf32>, vector<32x128xf32>, vector<128x128xf32> -> vector<128x128xf32>
    %c0_20 = arith.constant 0 : index
    %c0_21 = arith.constant 0 : index
    %22 = vector.load %arg9[%c0_20, %c0_21] : memref<1x128xf32, #tpu.memory_space<vmem>>, vector<1x128xf32>
    %23 = vector.broadcast %22 : vector<1x128xf32> to vector<128x128xf32>
    %24 = arith.addf %21, %23 : vector<128x128xf32>
    %25 = arith.negf %24 : vector<128x128xf32>
    %26 = math.exp %25 : vector<128x128xf32>
    %cst_22 = arith.constant 1.000000e+00 : f32
    %27 = vector.broadcast %cst_22 : f32 to vector<128x128xf32>
    %28 = arith.addf %27, %26 : vector<128x128xf32>
    %29 = arith.divf %27, %28 : vector<128x128xf32>
    %30 = arith.mulf %29, %0 : vector<128x128xf32>
    %cst_23 = arith.constant 1.000000e+00 : f32
    %31 = vector.broadcast %cst_23 : f32 to vector<128x128xf32>
    %32 = arith.subf %31, %29 : vector<128x128xf32>
    %33 = arith.mulf %32, %19 : vector<128x128xf32>
    %34 = arith.addf %30, %33 : vector<128x128xf32>
    %c0_24 = arith.constant 0 : index
    %c0_25 = arith.constant 0 : index
    %35 = vector.load %arg10[%c0_24, %c0_25] : memref<128x128xf32, #tpu.memory_space<vmem>>, vector<128x128xf32>
    tpu.vector_store %arg10[%c0_24, %c0_25], %34 {strides = array<i32>} : memref<128x128xf32, #tpu.memory_space<vmem>>, vector<128x128xf32>,
    %cst_26 = arith.constant 0.000000e+00 : f32
    %36 = vector.broadcast %cst_26 : f32 to vector<128x128xf32>
    %37 = arith.subf %36, %24 : vector<128x128xf32>
    %cst_27 = arith.constant 0.000000e+00 : f32
    %38 = vector.broadcast %cst_27 : f32 to vector<128x128xf32>
    %39 = arith.maximumf %38, %37 : vector<128x128xf32>
    %40 = vector.broadcast %cst_27 : f32 to vector<128x128xf32>
    %41 = arith.subf %40, %37 : vector<128x128xf32>
    %42 = arith.cmpf one, %41, %41 : vector<128x128xf32>
    %43 = vector.broadcast %cst_27 : f32 to vector<128x128xf32>
    %44 = arith.addf %43, %37 : vector<128x128xf32>
    %45 = math.absf %41 : vector<128x128xf32>
    %cst_28 = arith.constant 0.000000e+00 : f32
    %46 = vector.broadcast %cst_28 : f32 to vector<128x128xf32>
    %47 = arith.subf %46, %45 : vector<128x128xf32>
    %48 = math.exp %47 : vector<128x128xf32>
    %49 = math.log1p %48 : vector<128x128xf32>
    %50 = arith.addf %39, %49 : vector<128x128xf32>
    %51 = arith.select %42, %44, %50 : vector<128x128xi1>, vector<128x128xf32>
    %c0_29 = arith.constant 0 : index
    %c0_30 = arith.constant 0 : index
    %52 = vector.load %arg11[%c0_29, %c0_30] : memref<128x128xf32, #tpu.memory_space<vmem>>, vector<128x128xf32>
    tpu.vector_store %arg11[%c0_29, %c0_30], %51 {strides = array<i32>} : memref<128x128xf32, #tpu.memory_space<vmem>>, vector<128x128xf32>,
    return
  }
  func.func @transform_0(%arg0: i32) -> (i32, i32) {
    %c0_i32 = arith.constant 0 : i32
    %c0_i32_0 = arith.constant 0 : i32
    return %arg0, %c0_i32 : i32, i32
  }
  func.func @transform_1(%arg0: i32) -> (i32, i32) {
    %c0_i32 = arith.constant 0 : i32
    %c0_i32_0 = arith.constant 0 : i32
    %c0_i32_1 = arith.constant 0 : i32
    return %c0_i32, %c0_i32_0 : i32, i32
  }
  func.func @transform_2(%arg0: i32) -> (i32, i32) {
    %c0_i32 = arith.constant 0 : i32
    %c0_i32_0 = arith.constant 0 : i32
    %c0_i32_1 = arith.constant 0 : i32
    return %c0_i32, %c0_i32_0 : i32, i32
  }
  func.func @transform_3(%arg0: i32) -> (i32, i32) {
    %c0_i32 = arith.constant 0 : i32
    %c0_i32_0 = arith.constant 0 : i32
    %c0_i32_1 = arith.constant 0 : i32
    return %c0_i32, %c0_i32_0 : i32, i32
  }
  func.func @transform_4(%arg0: i32) -> (i32, i32) {
    %c0_i32 = arith.constant 0 : i32
    %c0_i32_0 = arith.constant 0 : i32
    %c0_i32_1 = arith.constant 0 : i32
    return %c0_i32, %c0_i32_0 : i32, i32
  }
  func.func @transform_5(%arg0: i32) -> (i32, i32) {
    %c0_i32 = arith.constant 0 : i32
    %c0_i32_0 = arith.constant 0 : i32
    %c0_i32_1 = arith.constant 0 : i32
    return %c0_i32, %c0_i32_0 : i32, i32
  }
  func.func @transform_6(%arg0: i32) -> (i32, i32) {
    %c0_i32 = arith.constant 0 : i32
    %c0_i32_0 = arith.constant 0 : i32
    %c0_i32_1 = arith.constant 0 : i32
    return %c0_i32, %c0_i32_0 : i32, i32
  }
  func.func @transform_7(%arg0: i32) -> (i32, i32) {
    %c0_i32 = arith.constant 0 : i32
    %c0_i32_0 = arith.constant 0 : i32
    %c0_i32_1 = arith.constant 0 : i32
    return %c0_i32, %c0_i32_0 : i32, i32
  }
  func.func @transform_8(%arg0: i32) -> (i32, i32) {
    %c0_i32 = arith.constant 0 : i32
    %c0_i32_0 = arith.constant 0 : i32
    %c0_i32_1 = arith.constant 0 : i32
    return %c0_i32, %c0_i32_0 : i32, i32
  }
  func.func @transform_9(%arg0: i32) -> (i32, i32) {
    %c0_i32 = arith.constant 0 : i32
    %c0_i32_0 = arith.constant 0 : i32
    return %arg0, %c0_i32 : i32, i32
  }
  func.func @transform_10(%arg0: i32) -> (i32, i32) {
    %c0_i32 = arith.constant 0 : i32
    %c0_i32_0 = arith.constant 0 : i32
    return %arg0, %c0_i32 : i32, i32
  }
}

</mosaic_0001>

<llo_original>
// kernel: tpu_custom_call.1
$region0: #{tpu_custom_call.1}
  #allocation0 [shape = 'u32[]', space=smem, size = 0x4, offset = 0x4, fixed_abs, tag = 'smem constant byte address 0x4 - core index']
  #allocation1 [shape = 'u32[72,128]{1,0:T(1,128)}', space=vmem, size = 0x9000, scoped, tag = 'internal scratch']
  %s0 = inlined_call_operand.hbm [shape: f32[256,128], index: 0, kind: input, shape index: {}]
  %s1 = inlined_call_operand.vmem [shape: f32[128,32], index: 1, kind: input, shape index: {}]
  %s2 = inlined_call_operand.vmem [shape: f32[1,32], index: 2, kind: input, shape index: {}]
  %s3 = inlined_call_operand.vmem [shape: f32[32,32], index: 3, kind: input, shape index: {}]
  %s4 = inlined_call_operand.vmem [shape: f32[1,32], index: 4, kind: input, shape index: {}]
  %s5 = inlined_call_operand.vmem [shape: f32[32,128], index: 5, kind: input, shape index: {}]
  %s6 = inlined_call_operand.vmem [shape: f32[1,128], index: 6, kind: input, shape index: {}]
  %s7 = inlined_call_operand.vmem [shape: f32[32,128], index: 7, kind: input, shape index: {}]
  %s8 = inlined_call_operand.vmem [shape: f32[1,128], index: 8, kind: input, shape index: {}]
  %s9 = inlined_call_operand.hbm [shape: f32[256,128], index: 9, kind: output, shape index: {0}]
  %s10 = inlined_call_operand.hbm [shape: f32[256,128], index: 10, kind: output, shape index: {1}]
  %11 = xla_tuple %s9, %s10
  %s12 = sld [smem:[#allocation0]]
  $region81: #{tpu_custom_call.1} parent=0
    _
  %s14 = ssub.s32 1, %s12
  %s15 = scalar_select 0, %s14, %s12
  $region1: #{tpu_custom_call.1} parent=0
    #allocation2 [shape = 'u8[131072]{0}', space=vmem, size = 0x20000, scoped, tag = 'input window, operand 0']
    #allocation3 [shape = 's32[2]{0}', space=sflag, size = 0x8, scoped, tag = 'scoped memory for tpu_custom_call.1']
    #allocation4 [shape = 's32[2]{0}', space=sflag, size = 0x8, scoped, tag = 'scoped memory for tpu_custom_call.1']
    #allocation5 [shape = 'u8[131072]{0}', space=vmem, size = 0x20000, scoped, tag = 'output window, operand 0']
    #allocation6 [shape = 'u8[131072]{0}', space=vmem, size = 0x20000, scoped, tag = 'output window, operand 1']
    #allocation7 [shape = 's32[2]{0}', space=sflag, size = 0x8, scoped, tag = 'scoped memory for tpu_custom_call.1']
    %16 = vsyncpa [#allocation3], 0
    %s17 = scalar_lea.sflag [#allocation3], 1
    %18 = vsyncpa %s17, 0
    %19 = vsyncpa [#allocation4], 0
    %s20 = scalar_lea.sflag [#allocation4], 1
    %21 = vsyncpa %s20, 0
    %22 = vsyncpa [#allocation7], 0
    %s23 = scalar_lea.sflag [#allocation7], 1
    %24 = vsyncpa %s23, 0
    loop: start=0, step=1, limit=4
    $region2: #{tpu_custom_call.1} parent=1 // loop_pre_header
      _
    $region3: #{tpu_custom_call.1} parent=1 // loop_header
      %s26 = sphi 0, %s30
      %p27 = scmp.ge.s32.totalorder %s26, 4
      %s36 = sphi 0, %s38
      %s39 = sphi 0, %s36
      %s40 = sphi 0, %s39
      %s56 = sphi 0, %s40
      %s60 = sphi 0, %s60
      %s62 = sphi 0, %s60
      %s63 = sphi 0, %s62
      %s77 = sphi 0, %s63
      %s81 = sphi 0, %s81
      %s83 = sphi 0, %s81
      %s84 = sphi 0, %s83
      %s98 = sphi 0, %s84
      %s102 = sphi 0, %s102
      %s104 = sphi 0, %s102
      %s105 = sphi 0, %s104
      %s119 = sphi 0, %s105
      %s123 = sphi 0, %s123
      %s125 = sphi 0, %s123
      %s126 = sphi 0, %s125
      %s140 = sphi 0, %s126
      %s144 = sphi 0, %s144
      %s146 = sphi 0, %s144
      %s147 = sphi 0, %s146
      %s161 = sphi 0, %s147
      %s165 = sphi 0, %s165
      %s167 = sphi 0, %s165
      %s168 = sphi 0, %s167
      %s182 = sphi 0, %s168
      %s186 = sphi 0, %s186
      %s188 = sphi 0, %s186
      %s189 = sphi 0, %s188
      %s203 = sphi 0, %s189
      %s207 = sphi 0, %s207
      %s209 = sphi 0, %s207
      %s210 = sphi 0, %s209
      %s224 = sphi 0, %s210
      %s230 = sphi 0, %s232
      %s233 = sphi 0, %s230
      %s234 = sphi 0, %s233
      %s250 = sphi 0, %s234
      %s256 = sphi 0, %s258
      %s259 = sphi 0, %s256
      %s260 = sphi 0, %s259
      %s276 = sphi 0, %s260
    $region4: #{tpu_custom_call.1} parent=1 // loop_header_branch
      %29 = sbr.rel (%p27) target = $region8
    $region5: #{tpu_custom_call.1} parent=1 // loop_body
      %s31 = ssub.s32 %s26, 1
      %s32 = ssub.s32 %s26, 2
      %s33 = sadd.s32 %s26, 1
      %s34 = ssub.s32 %s26, %s33
      %p35 = scmp.eq.s32.totalorder %s34, 0
      %s37 = sadd.s32 %s36, 1
      %s38 = scalar_select %p35, %s36, %s37
      %p41 = pneg %p35
      %p42 = scmp.eq.s32.totalorder %s26, 1
      %p43 = por %p41, %p42
      %p44 = scmp.ne.s32.totalorder %s36, %s39
      %p45 = scmp.eq.s32.totalorder %s26, 0
      %p46 = por %p44, %p45
      %p47 = scmp.ne.s32.totalorder %s36, %s39
      %p48 = scmp.eq.s32.totalorder %s31, 1
      %p49 = por %p47, %p48
      %p50 = scmp.ne.s32.totalorder %s39, %s40
      %p51 = scmp.eq.s32.totalorder %s31, 0
      %p52 = por %p50, %p51
      %p53 = scmp.ne.s32.totalorder %s39, %s40
      %p54 = scmp.eq.s32.totalorder %s32, 1
      %p55 = por %p53, %p54
      %p57 = scmp.ne.s32.totalorder %s40, %s56
      %p58 = scmp.eq.s32.totalorder %s32, 0
      %p59 = por %p57, %p58
      %s61 = sadd.s32 %s60, 1
      %p64 = scmp.eq.s32.totalorder %s26, 1
      %p65 = scmp.ne.s32.totalorder %s60, %s62
      %p66 = scmp.eq.s32.totalorder %s26, 0
      %p67 = por %p65, %p66
      %p68 = scmp.ne.s32.totalorder %s60, %s62
      %p69 = scmp.eq.s32.totalorder %s31, 1
      %p70 = por %p68, %p69
      %p71 = scmp.ne.s32.totalorder %s62, %s63
      %p72 = scmp.eq.s32.totalorder %s31, 0
      %p73 = por %p71, %p72
      %p74 = scmp.ne.s32.totalorder %s62, %s63
      %p75 = scmp.eq.s32.totalorder %s32, 1
      %p76 = por %p74, %p75
      %p78 = scmp.ne.s32.totalorder %s63, %s77
      %p79 = scmp.eq.s32.totalorder %s32, 0
      %p80 = por %p78, %p79
      %s82 = sadd.s32 %s81, 1
      %p85 = scmp.eq.s32.totalorder %s26, 1
      %p86 = scmp.ne.s32.totalorder %s81, %s83
      %p87 = scmp.eq.s32.totalorder %s26, 0
      %p88 = por %p86, %p87
      %p89 = scmp.ne.s32.totalorder %s81, %s83
      %p90 = scmp.eq.s32.totalorder %s31, 1
      %p91 = por %p89, %p90
      %p92 = scmp.ne.s32.totalorder %s83, %s84
      %p93 = scmp.eq.s32.totalorder %s31, 0
      %p94 = por %p92, %p93
      %p95 = scmp.ne.s32.totalorder %s83, %s84
      %p96 = scmp.eq.s32.totalorder %s32, 1
      %p97 = por %p95, %p96
      %p99 = scmp.ne.s32.totalorder %s84, %s98
      %p100 = scmp.eq.s32.totalorder %s32, 0
      %p101 = por %p99, %p100
      %s103 = sadd.s32 %s102, 1
      %p106 = scmp.eq.s32.totalorder %s26, 1
      %p107 = scmp.ne.s32.totalorder %s102, %s104
      %p108 = scmp.eq.s32.totalorder %s26, 0
      %p109 = por %p107, %p108
      %p110 = scmp.ne.s32.totalorder %s102, %s104
      %p111 = scmp.eq.s32.totalorder %s31, 1
      %p112 = por %p110, %p111
      %p113 = scmp.ne.s32.totalorder %s104, %s105
      %p114 = scmp.eq.s32.totalorder %s31, 0
      %p115 = por %p113, %p114
      %p116 = scmp.ne.s32.totalorder %s104, %s105
      %p117 = scmp.eq.s32.totalorder %s32, 1
      %p118 = por %p116, %p117
      %p120 = scmp.ne.s32.totalorder %s105, %s119
      %p121 = scmp.eq.s32.totalorder %s32, 0
      %p122 = por %p120, %p121
      %s124 = sadd.s32 %s123, 1
      %p127 = scmp.eq.s32.totalorder %s26, 1
      %p128 = scmp.ne.s32.totalorder %s123, %s125
      %p129 = scmp.eq.s32.totalorder %s26, 0
      %p130 = por %p128, %p129
      %p131 = scmp.ne.s32.totalorder %s123, %s125
      %p132 = scmp.eq.s32.totalorder %s31, 1
      %p133 = por %p131, %p132
      %p134 = scmp.ne.s32.totalorder %s125, %s126
      %p135 = scmp.eq.s32.totalorder %s31, 0
      %p136 = por %p134, %p135
      %p137 = scmp.ne.s32.totalorder %s125, %s126
      %p138 = scmp.eq.s32.totalorder %s32, 1
      %p139 = por %p137, %p138
      %p141 = scmp.ne.s32.totalorder %s126, %s140
      %p142 = scmp.eq.s32.totalorder %s32, 0
      %p143 = por %p141, %p142
      %s145 = sadd.s32 %s144, 1
      %p148 = scmp.eq.s32.totalorder %s26, 1
      %p149 = scmp.ne.s32.totalorder %s144, %s146
      %p150 = scmp.eq.s32.totalorder %s26, 0
      %p151 = por %p149, %p150
      %p152 = scmp.ne.s32.totalorder %s144, %s146
      %p153 = scmp.eq.s32.totalorder %s31, 1
      %p154 = por %p152, %p153
      %p155 = scmp.ne.s32.totalorder %s146, %s147
      %p156 = scmp.eq.s32.totalorder %s31, 0
      %p157 = por %p155, %p156
      %p158 = scmp.ne.s32.totalorder %s146, %s147
      %p159 = scmp.eq.s32.totalorder %s32, 1
      %p160 = por %p158, %p159
      %p162 = scmp.ne.s32.totalorder %s147, %s161
      %p163 = scmp.eq.s32.totalorder %s32, 0
      %p164 = por %p162, %p163
      %s166 = sadd.s32 %s165, 1
      %p169 = scmp.eq.s32.totalorder %s26, 1
      %p170 = scmp.ne.s32.totalorder %s165, %s167
      %p171 = scmp.eq.s32.totalorder %s26, 0
      %p172 = por %p170, %p171
      %p173 = scmp.ne.s32.totalorder %s165, %s167
      %p174 = scmp.eq.s32.totalorder %s31, 1
      %p175 = por %p173, %p174
      %p176 = scmp.ne.s32.totalorder %s167, %s168
      %p177 = scmp.eq.s32.totalorder %s31, 0
      %p178 = por %p176, %p177
      %p179 = scmp.ne.s32.totalorder %s167, %s168
      %p180 = scmp.eq.s32.totalorder %s32, 1
      %p181 = por %p179, %p180
      %p183 = scmp.ne.s32.totalorder %s168, %s182
      %p184 = scmp.eq.s32.totalorder %s32, 0
      %p185 = por %p183, %p184
      %s187 = sadd.s32 %s186, 1
      %p190 = scmp.eq.s32.totalorder %s26, 1
      %p191 = scmp.ne.s32.totalorder %s186, %s188
      %p192 = scmp.eq.s32.totalorder %s26, 0
      %p193 = por %p191, %p192
      %p194 = scmp.ne.s32.totalorder %s186, %s188
      %p195 = scmp.eq.s32.totalorder %s31, 1
      %p196 = por %p194, %p195
      %p197 = scmp.ne.s32.totalorder %s188, %s189
      %p198 = scmp.eq.s32.totalorder %s31, 0
      %p199 = por %p197, %p198
      %p200 = scmp.ne.s32.totalorder %s188, %s189
      %p201 = scmp.eq.s32.totalorder %s32, 1
      %p202 = por %p200, %p201
      %p204 = scmp.ne.s32.totalorder %s189, %s203
      %p205 = scmp.eq.s32.totalorder %s32, 0
      %p206 = por %p204, %p205
      %s208 = sadd.s32 %s207, 1
      %p211 = scmp.eq.s32.totalorder %s26, 1
      %p212 = scmp.ne.s32.totalorder %s207, %s209
      %p213 = scmp.eq.s32.totalorder %s26, 0
      %p214 = por %p212, %p213
      %p215 = scmp.ne.s32.totalorder %s207, %s209
      %p216 = scmp.eq.s32.totalorder %s31, 1
      %p217 = por %p215, %p216
      %p218 = scmp.ne.s32.totalorder %s209, %s210
      %p219 = scmp.eq.s32.totalorder %s31, 0
      %p220 = por %p218, %p219
      %p221 = scmp.ne.s32.totalorder %s209, %s210
      %p222 = scmp.eq.s32.totalorder %s32, 1
      %p223 = por %p221, %p222
      %p225 = scmp.ne.s32.totalorder %s210, %s224
      %p226 = scmp.eq.s32.totalorder %s32, 0
      %p227 = por %p225, %p226
      %s228 = ssub.s32 %s26, %s33
      %p229 = scmp.eq.s32.totalorder %s228, 0
      %s231 = sadd.s32 %s230, 1
      %s232 = scalar_select %p229, %s230, %s231
      %p235 = pneg %p229
      %p236 = scmp.eq.s32.totalorder %s26, 1
      %p237 = por %p235, %p236
      %p238 = scmp.ne.s32.totalorder %s230, %s233
      %p239 = scmp.eq.s32.totalorder %s26, 0
      %p240 = por %p238, %p239
      %p241 = scmp.ne.s32.totalorder %s230, %s233
      %p242 = scmp.eq.s32.totalorder %s31, 1
      %p243 = por %p241, %p242
      %p244 = scmp.ne.s32.totalorder %s233, %s234
      %p245 = scmp.eq.s32.totalorder %s31, 0
      %p246 = por %p244, %p245
      %p247 = scmp.ne.s32.totalorder %s233, %s234
      %p248 = scmp.eq.s32.totalorder %s32, 1
      %p249 = por %p247, %p248
      %p251 = scmp.ne.s32.totalorder %s234, %s250
      %p252 = scmp.eq.s32.totalorder %s32, 0
      %p253 = por %p251, %p252
      %s254 = ssub.s32 %s26, %s33
      %p255 = scmp.eq.s32.totalorder %s254, 0
      %s257 = sadd.s32 %s256, 1
      %s258 = scalar_select %p255, %s256, %s257
      %p261 = pneg %p255
      %p262 = scmp.eq.s32.totalorder %s26, 1
      %p263 = por %p261, %p262
      %p264 = scmp.ne.s32.totalorder %s256, %s259
      %p265 = scmp.eq.s32.totalorder %s26, 0
      %p266 = por %p264, %p265
      %p267 = scmp.ne.s32.totalorder %s256, %s259
      %p268 = scmp.eq.s32.totalorder %s31, 1
      %p269 = por %p267, %p268
      %p270 = scmp.ne.s32.totalorder %s259, %s260
      %p271 = scmp.eq.s32.totalorder %s31, 0
      %p272 = por %p270, %p271
      %p273 = scmp.ne.s32.totalorder %s259, %s260
      %p274 = scmp.eq.s32.totalorder %s32, 1
      %p275 = por %p273, %p274
      %p277 = scmp.ne.s32.totalorder %s260, %s276
      %p278 = scmp.eq.s32.totalorder %s32, 0
      %p279 = por %p277, %p278
      %p280 = scmp.le.s32.totalorder 1, %s26
      %p281 = scmp.lt.s32.totalorder %s26, 3
      %p282 = pnand %p280, %p281
      %p283 = pneg %p282
      // Predicated region
      $region9: #{tpu_custom_call.1} parent=5 // pred_check
        _
      $region10: #{tpu_custom_call.1} parent=5 // pred_check_branch
        %285 = sbr.rel (%p282) target = $region12
      $region11: #{tpu_custom_call.1} parent=5 // pred_region
        %s286 = ssub.s32 %s26, 1
        // Predicated region
        $region13: #{tpu_custom_call.1} parent=11 // pred_check
          %p287 = pneg %p73
        $region14: #{tpu_custom_call.1} parent=11 // pred_check_branch
          %289 = sbr.rel (%p287) target = $region16
        $region15: #{tpu_custom_call.1} parent=11 // pred_region
          _
        $region16: #{tpu_custom_call.1} parent=11 // pred_fallthru
          _
        // Predicated region
        $region17: #{tpu_custom_call.1} parent=11 // pred_check
          %p290 = pneg %p94
        $region18: #{tpu_custom_call.1} parent=11 // pred_check_branch
          %292 = sbr.rel (%p290) target = $region20
        $region19: #{tpu_custom_call.1} parent=11 // pred_region
          _
        $region20: #{tpu_custom_call.1} parent=11 // pred_fallthru
          _
        // Predicated region
        $region21: #{tpu_custom_call.1} parent=11 // pred_check
          %p293 = pneg %p115
        $region22: #{tpu_custom_call.1} parent=11 // pred_check_branch
          %295 = sbr.rel (%p293) target = $region24
        $region23: #{tpu_custom_call.1} parent=11 // pred_region
          _
        $region24: #{tpu_custom_call.1} parent=11 // pred_fallthru
          _
        // Predicated region
        $region25: #{tpu_custom_call.1} parent=11 // pred_check
          %p296 = pneg %p136
        $region26: #{tpu_custom_call.1} parent=11 // pred_check_branch
          %298 = sbr.rel (%p296) target = $region28
        $region27: #{tpu_custom_call.1} parent=11 // pred_region
          _
        $region28: #{tpu_custom_call.1} parent=11 // pred_fallthru
          _
        // Predicated region
        $region29: #{tpu_custom_call.1} parent=11 // pred_check
          %p299 = pneg %p157
        $region30: #{tpu_custom_call.1} parent=11 // pred_check_branch
          %301 = sbr.rel (%p299) target = $region32
        $region31: #{tpu_custom_call.1} parent=11 // pred_region
          _
        $region32: #{tpu_custom_call.1} parent=11 // pred_fallthru
          _
        // Predicated region
        $region33: #{tpu_custom_call.1} parent=11 // pred_check
          %p302 = pneg %p178
        $region34: #{tpu_custom_call.1} parent=11 // pred_check_branch
          %304 = sbr.rel (%p302) target = $region36
        $region35: #{tpu_custom_call.1} parent=11 // pred_region
          _
        $region36: #{tpu_custom_call.1} parent=11 // pred_fallthru
          _
        // Predicated region
        $region37: #{tpu_custom_call.1} parent=11 // pred_check
          %p305 = pneg %p199
        $region38: #{tpu_custom_call.1} parent=11 // pred_check_branch
          %307 = sbr.rel (%p305) target = $region40
        $region39: #{tpu_custom_call.1} parent=11 // pred_region
          _
        $region40: #{tpu_custom_call.1} parent=11 // pred_fallthru
          _
        // Predicated region
        $region41: #{tpu_custom_call.1} parent=11 // pred_check
          %p308 = pneg %p220
        $region42: #{tpu_custom_call.1} parent=11 // pred_check_branch
          %310 = sbr.rel (%p308) target = $region44
        $region43: #{tpu_custom_call.1} parent=11 // pred_region
          _
        $region44: #{tpu_custom_call.1} parent=11 // pred_fallthru
          _
      $region12: #{tpu_custom_call.1} parent=5 // pred_fallthru
        _
      %p311 = scmp.lt.s32.totalorder %s26, 2
      // Predicated region
      $region45: #{tpu_custom_call.1} parent=5 // pred_check
        %p312 = pneg %p311
      $region46: #{tpu_custom_call.1} parent=5 // pred_check_branch
        %314 = sbr.rel (%p312) target = $region48
      $region47: #{tpu_custom_call.1} parent=5 // pred_region
        // Predicated region
        $region49: #{tpu_custom_call.1} parent=47 // pred_check
          %p315 = pneg %p46
        $region50: #{tpu_custom_call.1} parent=47 // pred_check_branch
          %317 = sbr.rel (%p315) target = $region52
        $region51: #{tpu_custom_call.1} parent=47 // pred_region
          %s318 = sand.u32 %s36, 1
          %s319 = scalar_lea.sflag [#allocation3], %s318
          %s320 = sand.u32 %s36, 1
          %s321 = smul.addr %s320, 128
          %s322 = scalar_lea.vmem [#allocation2], %s321
          %s323 = smul.u32 16, %s26
          %325 = vsyncadd %s319, 0
          %s326 = smul.addr %s323, 8
          %s327 = scalar_lea.hbm %s0, %s326
          %s328 = sshll.u32 %s327, 4
          %s329 = int_to_ptr.hbm [resolvable:$true] %s328
          %s330 = sshll.u32 %s322, 4
          %s331 = int_to_ptr.vmem [resolvable:$true] %s330
          %336 = dma.hbm_to_vmem [thread:$0]  %s329, 2048, %s331, %s319, 128, 128, 8
        $region52: #{tpu_custom_call.1} parent=47 // pred_fallthru
          _
      $region48: #{tpu_custom_call.1} parent=5 // pred_fallthru
        _
      %p337 = scmp.le.s32.totalorder 1, %s26
      %p338 = scmp.lt.s32.totalorder %s26, 3
      %p339 = pnand %p337, %p338
      %p340 = pneg %p339
      // Predicated region
      $region53: #{tpu_custom_call.1} parent=5 // pred_check
        _
      $region54: #{tpu_custom_call.1} parent=5 // pred_check_branch
        %342 = sbr.rel (%p339) target = $region56
      $region55: #{tpu_custom_call.1} parent=5 // pred_region
        %s343 = ssub.s32 %s26, 1
        %s344 = sand.u32 %s39, 1
        %s345 = scalar_lea.sflag [#allocation3], %s344
        %s346 = sand.u32 %s39, 1
        %s347 = smul.addr %s346, 128
        %s348 = scalar_lea.vmem [#allocation2], %s347
        // Predicated region
        $region57: #{tpu_custom_call.1} parent=55 // pred_check
          %p349 = pneg %p52
        $region58: #{tpu_custom_call.1} parent=55 // pred_check_branch
          %351 = sbr.rel (%p349) target = $region60
        $region59: #{tpu_custom_call.1} parent=55 // pred_region
          %353 = dma.done %s345, 2048
        $region60: #{tpu_custom_call.1} parent=55 // pred_fallthru
          _
        %s354 = sand.u32 %s39, 1
        %s355 = scalar_lea.sflag [#allocation3], %s354
        %s356 = sand.u32 %s39, 1
        %s357 = smul.addr %s356, 128
        %s358 = scalar_lea.vmem [#allocation2], %s357
        %p359 = pneg %p52
        %p360 = pneg %p49
        %p361 = pneg %p73
        %p362 = pneg %p70
        %p363 = pneg %p94
        %p364 = pneg %p91
        %p365 = pneg %p115
        %p366 = pneg %p112
        %p367 = pneg %p136
        %p368 = pneg %p133
        %p369 = pneg %p157
        %p370 = pneg %p154
        %p371 = pneg %p178
        %p372 = pneg %p175
        %p373 = pneg %p199
        %p374 = pneg %p196
        %p375 = pneg %p220
        %p376 = pneg %p217
        %p377 = pneg %p246
        %p378 = pneg %p243
        %s379 = sand.u32 %s233, 1
        %s380 = scalar_lea.sflag [#allocation4], %s379
        %s381 = sand.u32 %s233, 1
        %s382 = smul.addr %s381, 128
        %s383 = scalar_lea.vmem [#allocation5], %s382
        %p384 = pneg %p272
        %p385 = pneg %p269
        %s386 = sand.u32 %s259, 1
        %s387 = scalar_lea.sflag [#allocation7], %s386
        %s388 = sand.u32 %s259, 1
        %s389 = smul.addr %s388, 128
        %s390 = scalar_lea.vmem [#allocation6], %s389
        %s391 = smul.u32 16, %s31
        %s392 = smul.u32 16, %s31
        %s393 = smul.u32 16, %s31
        %v394 = vld [vmem:[%s348] sm:$0xff]
        %v395 = vld [vmem:[%s348 + $0x8] sm:$0xff]
        %v396 = vld [vmem:[%s348 + $0x10] sm:$0xff]
        %v397 = vld [vmem:[%s348 + $0x18] sm:$0xff]
        %v398 = vld [vmem:[%s348 + $0x20] sm:$0xff]
        %v399 = vld [vmem:[%s348 + $0x28] sm:$0xff]
        %v400 = vld [vmem:[%s348 + $0x30] sm:$0xff]
        %v401 = vld [vmem:[%s348 + $0x38] sm:$0xff]
        %v402 = vld [vmem:[%s348 + $0x40] sm:$0xff]
        %v403 = vld [vmem:[%s348 + $0x48] sm:$0xff]
        %v404 = vld [vmem:[%s348 + $0x50] sm:$0xff]
        %v405 = vld [vmem:[%s348 + $0x58] sm:$0xff]
        %v406 = vld [vmem:[%s348 + $0x60] sm:$0xff]
        %v407 = vld [vmem:[%s348 + $0x68] sm:$0xff]
        %v408 = vld [vmem:[%s348 + $0x70] sm:$0xff]
        %v409 = vld [vmem:[%s348 + $0x78] sm:$0xff]
        %v410 = vld [vmem:[%s1] sm:$0xff]
        %v411 = vld [vmem:[%s1 + $0x8] sm:$0xff]
        %v412 = vld [vmem:[%s1 + $0x10] sm:$0xff]
        %v413 = vld [vmem:[%s1 + $0x18] sm:$0xff]
        %v414 = vld [vmem:[%s1 + $0x20] sm:$0xff]
        %v415 = vld [vmem:[%s1 + $0x28] sm:$0xff]
        %v416 = vld [vmem:[%s1 + $0x30] sm:$0xff]
        %v417 = vld [vmem:[%s1 + $0x38] sm:$0xff]
        %v418 = vld [vmem:[%s1 + $0x40] sm:$0xff]
        %v419 = vld [vmem:[%s1 + $0x48] sm:$0xff]
        %v420 = vld [vmem:[%s1 + $0x50] sm:$0xff]
        %v421 = vld [vmem:[%s1 + $0x58] sm:$0xff]
        %v422 = vld [vmem:[%s1 + $0x60] sm:$0xff]
        %v423 = vld [vmem:[%s1 + $0x68] sm:$0xff]
        %v424 = vld [vmem:[%s1 + $0x70] sm:$0xff]
        %v425 = vld [vmem:[%s1 + $0x78] sm:$0xff]
        %v426 = vld [vmem:[%s2] sm:$0x1]
        %v428 = vperm.slane %v426, 0
        %430 = vmatpush.msra.mxu0 %v425
        %431 = vmatpush.msra.mxu0 %v424
        %432 = vmatpush.msra.mxu0 %v423
        %433 = vmatpush.msra.mxu0 %v422
        %434 = vmatpush.msra.mxu0 %v421
        %435 = vmatpush.msra.mxu0 %v420
        %436 = vmatpush.msra.mxu0 %v419
        %437 = vmatpush.msra.mxu0 %v418
        %438 = vmatpush.msra.mxu0 %v417
        %439 = vmatpush.msra.mxu0 %v416
        %440 = vmatpush.msra.mxu0 %v415
        %441 = vmatpush.msra.mxu0 %v414
        %442 = vmatpush.msra.mxu0 %v413
        %443 = vmatpush.msra.mxu0 %v412
        %444 = vmatpush.msra.mxu0 %v411
        %445 = vmatpush.msra.mxu0 %v410
        %446 = vmatmul.f32.gmra.mxu0 %v394
        %v447 = vpop.f32.mrf.mxu0
        %v448 = vadd.f32 %v428, %v447
        %449 = vmatmul.f32.gmra.mxu0 %v395
        %v450 = vpop.f32.mrf.mxu0
        %v451 = vadd.f32 %v428, %v450
        %452 = vmatmul.f32.gmra.mxu0 %v396
        %v453 = vpop.f32.mrf.mxu0
        %v454 = vadd.f32 %v428, %v453
        %455 = vmatmul.f32.gmra.mxu0 %v397
        %v456 = vpop.f32.mrf.mxu0
        %v457 = vadd.f32 %v428, %v456
        %458 = vmatmul.f32.gmra.mxu0 %v398
        %v459 = vpop.f32.mrf.mxu0
        %v460 = vadd.f32 %v428, %v459
        %461 = vmatmul.f32.gmra.mxu0 %v399
        %v462 = vpop.f32.mrf.mxu0
        %v463 = vadd.f32 %v428, %v462
        %464 = vmatmul.f32.gmra.mxu0 %v400
        %v465 = vpop.f32.mrf.mxu0
        %v466 = vadd.f32 %v428, %v465
        %467 = vmatmul.f32.gmra.mxu0 %v401
        %v468 = vpop.f32.mrf.mxu0
        %v469 = vadd.f32 %v428, %v468
        %470 = vmatmul.f32.gmra.mxu0 %v402
        %v471 = vpop.f32.mrf.mxu0
        %v472 = vadd.f32 %v428, %v471
        %473 = vmatmul.f32.gmra.mxu0 %v403
        %v474 = vpop.f32.mrf.mxu0
        %v475 = vadd.f32 %v428, %v474
        %476 = vmatmul.f32.gmra.mxu0 %v404
        %v477 = vpop.f32.mrf.mxu0
        %v478 = vadd.f32 %v428, %v477
        %479 = vmatmul.f32.gmra.mxu0 %v405
        %v480 = vpop.f32.mrf.mxu0
        %v481 = vadd.f32 %v428, %v480
        %482 = vmatmul.f32.gmra.mxu0 %v406
        %v483 = vpop.f32.mrf.mxu0
        %v484 = vadd.f32 %v428, %v483
        %485 = vmatmul.f32.gmra.mxu0 %v407
        %v486 = vpop.f32.mrf.mxu0
        %v487 = vadd.f32 %v428, %v486
        %488 = vmatmul.f32.gmra.mxu0 %v408
        %v489 = vpop.f32.mrf.mxu0
        %v490 = vadd.f32 %v428, %v489
        %491 = vmatmul.f32.gmra.mxu0 %v409
        %v492 = vpop.f32.mrf.mxu0
        %v493 = vadd.f32 %v428, %v492
        %494 = vdwg.mxu0
        %v495 = vmax.f32 %v448, 0.0
        %v496 = vmax.f32 %v451, 0.0
        %v497 = vmax.f32 %v454, 0.0
        %v498 = vmax.f32 %v457, 0.0
        %v499 = vmax.f32 %v460, 0.0
        %v500 = vmax.f32 %v463, 0.0
        %v501 = vmax.f32 %v466, 0.0
        %v502 = vmax.f32 %v469, 0.0
        %v503 = vmax.f32 %v472, 0.0
        %v504 = vmax.f32 %v475, 0.0
        %v505 = vmax.f32 %v478, 0.0
        %v506 = vmax.f32 %v481, 0.0
        %v507 = vmax.f32 %v484, 0.0
        %v508 = vmax.f32 %v487, 0.0
        %v509 = vmax.f32 %v490, 0.0
        %v510 = vmax.f32 %v493, 0.0
        %v511 = vld [vmem:[%s3] sm:$0xff]
        %v512 = vld [vmem:[%s3 + $0x8] sm:$0xff]
        %v513 = vld [vmem:[%s3 + $0x10] sm:$0xff]
        %v514 = vld [vmem:[%s3 + $0x18] sm:$0xff]
        %v515 = vld [vmem:[%s4] sm:$0x1]
        %v517 = vperm.slane %v515, 0
        %vm519 = vcmask 261120
        %v521 = vsel %vm519, %v495, 0
        %v524 = vsel %vm519, %v496, 0
        %v527 = vsel %vm519, %v497, 0
        %v530 = vsel %vm519, %v498, 0
        %v533 = vsel %vm519, %v499, 0
        %v536 = vsel %vm519, %v500, 0
        %v539 = vsel %vm519, %v501, 0
        %v542 = vsel %vm519, %v502, 0
        %v545 = vsel %vm519, %v503, 0
        %v548 = vsel %vm519, %v504, 0
        %v551 = vsel %vm519, %v505, 0
        %v554 = vsel %vm519, %v506, 0
        %v557 = vsel %vm519, %v507, 0
        %v560 = vsel %vm519, %v508, 0
        %v563 = vsel %vm519, %v509, 0
        %v566 = vsel %vm519, %v510, 0
        %568 = vmatpush.msra.mxu0 0.0
        %569 = vmatpush.msra.mxu0 0.0
        %570 = vmatpush.msra.mxu0 0.0
        %571 = vmatpush.msra.mxu0 0.0
        %572 = vmatpush.msra.mxu0 0.0
        %573 = vmatpush.msra.mxu0 0.0
        %574 = vmatpush.msra.mxu0 0.0
        %575 = vmatpush.msra.mxu0 0.0
        %576 = vmatpush.msra.mxu0 0.0
        %577 = vmatpush.msra.mxu0 0.0
        %578 = vmatpush.msra.mxu0 0.0
        %579 = vmatpush.msra.mxu0 0.0
        %580 = vmatpush.msra.mxu0 %v514
        %581 = vmatpush.msra.mxu0 %v513
        %582 = vmatpush.msra.mxu0 %v512
        %583 = vmatpush.msra.mxu0 %v511
        %584 = vmatmul.f32.gmra.mxu0 %v521
        %v585 = vpop.f32.mrf.mxu0
        %v586 = vadd.f32 %v517, %v585
        %587 = vmatmul.f32.gmra.mxu0 %v524
        %v588 = vpop.f32.mrf.mxu0
        %v589 = vadd.f32 %v517, %v588
        %590 = vmatmul.f32.gmra.mxu0 %v527
        %v591 = vpop.f32.mrf.mxu0
        %v592 = vadd.f32 %v517, %v591
        %593 = vmatmul.f32.gmra.mxu0 %v530
        %v594 = vpop.f32.mrf.mxu0
        %v595 = vadd.f32 %v517, %v594
        %596 = vmatmul.f32.gmra.mxu0 %v533
        %v597 = vpop.f32.mrf.mxu0
        %v598 = vadd.f32 %v517, %v597
        %599 = vmatmul.f32.gmra.mxu0 %v536
        %v600 = vpop.f32.mrf.mxu0
        %v601 = vadd.f32 %v517, %v600
        %602 = vmatmul.f32.gmra.mxu0 %v539
        %v603 = vpop.f32.mrf.mxu0
        %v604 = vadd.f32 %v517, %v603
        %605 = vmatmul.f32.gmra.mxu0 %v542
        %v606 = vpop.f32.mrf.mxu0
        %v607 = vadd.f32 %v517, %v606
        %608 = vmatmul.f32.gmra.mxu0 %v545
        %v609 = vpop.f32.mrf.mxu0
        %v610 = vadd.f32 %v517, %v609
        %611 = vmatmul.f32.gmra.mxu0 %v548
        %v612 = vpop.f32.mrf.mxu0
        %v613 = vadd.f32 %v517, %v612
        %614 = vmatmul.f32.gmra.mxu0 %v551
        %v615 = vpop.f32.mrf.mxu0
        %v616 = vadd.f32 %v517, %v615
        %617 = vmatmul.f32.gmra.mxu0 %v554
        %v618 = vpop.f32.mrf.mxu0
        %v619 = vadd.f32 %v517, %v618
        %620 = vmatmul.f32.gmra.mxu0 %v557
        %v621 = vpop.f32.mrf.mxu0
        %v622 = vadd.f32 %v517, %v621
        %623 = vmatmul.f32.gmra.mxu0 %v560
        %v624 = vpop.f32.mrf.mxu0
        %v625 = vadd.f32 %v517, %v624
        %626 = vmatmul.f32.gmra.mxu0 %v563
        %v627 = vpop.f32.mrf.mxu0
        %v628 = vadd.f32 %v517, %v627
        %629 = vmatmul.f32.gmra.mxu0 %v566
        %v630 = vpop.f32.mrf.mxu0
        %v631 = vadd.f32 %v517, %v630
        %632 = vdwg.mxu0
        %v633 = vmax.f32 %v586, 0.0
        %v634 = vmax.f32 %v589, 0.0
        %v635 = vmax.f32 %v592, 0.0
        %v636 = vmax.f32 %v595, 0.0
        %v637 = vmax.f32 %v598, 0.0
        %v638 = vmax.f32 %v601, 0.0
        %v639 = vmax.f32 %v604, 0.0
        %v640 = vmax.f32 %v607, 0.0
        %v641 = vmax.f32 %v610, 0.0
        %v642 = vmax.f32 %v613, 0.0
        %v643 = vmax.f32 %v616, 0.0
        %v644 = vmax.f32 %v619, 0.0
        %v645 = vmax.f32 %v622, 0.0
        %v646 = vmax.f32 %v625, 0.0
        %v647 = vmax.f32 %v628, 0.0
        %v648 = vmax.f32 %v631, 0.0
        %v649 = vld [vmem:[%s5] sm:$0xff]
        %v650 = vld [vmem:[%s5 + $0x8] sm:$0xff]
        %v651 = vld [vmem:[%s5 + $0x10] sm:$0xff]
        %v652 = vld [vmem:[%s5 + $0x18] sm:$0xff]
        %v653 = vld [vmem:[%s6] sm:$0x1]
        %v655 = vperm.slane %v653, 0
        %v658 = vsel %vm519, %v633, 0
        %v661 = vsel %vm519, %v634, 0
        %v664 = vsel %vm519, %v635, 0
        %v667 = vsel %vm519, %v636, 0
        %v670 = vsel %vm519, %v637, 0
        %v673 = vsel %vm519, %v638, 0
        %v676 = vsel %vm519, %v639, 0
        %v679 = vsel %vm519, %v640, 0
        %v682 = vsel %vm519, %v641, 0
        %v685 = vsel %vm519, %v642, 0
        %v688 = vsel %vm519, %v643, 0
        %v691 = vsel %vm519, %v644, 0
        %v694 = vsel %vm519, %v645, 0
        %v697 = vsel %vm519, %v646, 0
        %v700 = vsel %vm519, %v647, 0
        %v703 = vsel %vm519, %v648, 0
        %705 = vmatpush.msra.mxu0 0.0
        %706 = vmatpush.msra.mxu0 0.0
        %707 = vmatpush.msra.mxu0 0.0
        %708 = vmatpush.msra.mxu0 0.0
        %709 = vmatpush.msra.mxu0 0.0
        %710 = vmatpush.msra.mxu0 0.0
        %711 = vmatpush.msra.mxu0 0.0
        %712 = vmatpush.msra.mxu0 0.0
        %713 = vmatpush.msra.mxu0 0.0
        %714 = vmatpush.msra.mxu0 0.0
        %715 = vmatpush.msra.mxu0 0.0
        %716 = vmatpush.msra.mxu0 0.0
        %717 = vmatpush.msra.mxu0 %v652
        %718 = vmatpush.msra.mxu0 %v651
        %719 = vmatpush.msra.mxu0 %v650
        %720 = vmatpush.msra.mxu0 %v649
        %721 = vmatmul.f32.gmra.mxu0 %v658
        %v722 = vpop.f32.mrf.mxu0
        %v723 = vadd.f32 %v655, %v722
        %724 = vmatmul.f32.gmra.mxu0 %v661
        %v725 = vpop.f32.mrf.mxu0
        %v726 = vadd.f32 %v655, %v725
        %727 = vmatmul.f32.gmra.mxu0 %v664
        %v728 = vpop.f32.mrf.mxu0
        %v729 = vadd.f32 %v655, %v728
        %730 = vmatmul.f32.gmra.mxu0 %v667
        %v731 = vpop.f32.mrf.mxu0
        %v732 = vadd.f32 %v655, %v731
        %733 = vmatmul.f32.gmra.mxu0 %v670
        %v734 = vpop.f32.mrf.mxu0
        %v735 = vadd.f32 %v655, %v734
        %736 = vmatmul.f32.gmra.mxu0 %v673
        %v737 = vpop.f32.mrf.mxu0
        %v738 = vadd.f32 %v655, %v737
        %739 = vmatmul.f32.gmra.mxu0 %v676
        %v740 = vpop.f32.mrf.mxu0
        %v741 = vadd.f32 %v655, %v740
        %742 = vmatmul.f32.gmra.mxu0 %v679
        %v743 = vpop.f32.mrf.mxu0
        %v744 = vadd.f32 %v655, %v743
        %745 = vmatmul.f32.gmra.mxu0 %v682
        %v746 = vpop.f32.mrf.mxu0
        %v747 = vadd.f32 %v655, %v746
        %748 = vmatmul.f32.gmra.mxu0 %v685
        %v749 = vpop.f32.mrf.mxu0
        %v750 = vadd.f32 %v655, %v749
        %751 = vmatmul.f32.gmra.mxu0 %v688
        %v752 = vpop.f32.mrf.mxu0
        %v753 = vadd.f32 %v655, %v752
        %754 = vmatmul.f32.gmra.mxu0 %v691
        %v755 = vpop.f32.mrf.mxu0
        %v756 = vadd.f32 %v655, %v755
        %757 = vmatmul.f32.gmra.mxu0 %v694
        %v758 = vpop.f32.mrf.mxu0
        %v759 = vadd.f32 %v655, %v758
        %760 = vmatmul.f32.gmra.mxu0 %v697
        %v761 = vpop.f32.mrf.mxu0
        %v762 = vadd.f32 %v655, %v761
        %763 = vmatmul.f32.gmra.mxu0 %v700
        %v764 = vpop.f32.mrf.mxu0
        %v765 = vadd.f32 %v655, %v764
        %766 = vmatmul.f32.gmra.mxu0 %v703
        %v767 = vpop.f32.mrf.mxu0
        %v768 = vadd.f32 %v655, %v767
        %769 = vdwg.mxu0
        %v770 = vld [vmem:[%s7] sm:$0xff]
        %v771 = vld [vmem:[%s7 + $0x8] sm:$0xff]
        %v772 = vld [vmem:[%s7 + $0x10] sm:$0xff]
        %v773 = vld [vmem:[%s7 + $0x18] sm:$0xff]
        %v774 = vld [vmem:[%s8] sm:$0x1]
        %v776 = vperm.slane %v774, 0
        %778 = vmatpush.msra.mxu0 0.0
        %779 = vmatpush.msra.mxu0 0.0
        %780 = vmatpush.msra.mxu0 0.0
        %781 = vmatpush.msra.mxu0 0.0
        %782 = vmatpush.msra.mxu0 0.0
        %783 = vmatpush.msra.mxu0 0.0
        %784 = vmatpush.msra.mxu0 0.0
        %785 = vmatpush.msra.mxu0 0.0
        %786 = vmatpush.msra.mxu0 0.0
        %787 = vmatpush.msra.mxu0 0.0
        %788 = vmatpush.msra.mxu0 0.0
        %789 = vmatpush.msra.mxu0 0.0
        %790 = vmatpush.msra.mxu0 %v773
        %791 = vmatpush.msra.mxu0 %v772
        %792 = vmatpush.msra.mxu0 %v771
        %793 = vmatpush.msra.mxu0 %v770
        %794 = vmatmul.f32.gmra.mxu0 %v658
        %v795 = vpop.f32.mrf.mxu0
        %v796 = vadd.f32 %v776, %v795
        %797 = vmatmul.f32.gmra.mxu0 %v661
        %v798 = vpop.f32.mrf.mxu0
        %v799 = vadd.f32 %v776, %v798
        %800 = vmatmul.f32.gmra.mxu0 %v664
        %v801 = vpop.f32.mrf.mxu0
        %v802 = vadd.f32 %v776, %v801
        %803 = vmatmul.f32.gmra.mxu0 %v667
        %v804 = vpop.f32.mrf.mxu0
        %v805 = vadd.f32 %v776, %v804
        %806 = vmatmul.f32.gmra.mxu0 %v670
        %v807 = vpop.f32.mrf.mxu0
        %v808 = vadd.f32 %v776, %v807
        %809 = vmatmul.f32.gmra.mxu0 %v673
        %v810 = vpop.f32.mrf.mxu0
        %v811 = vadd.f32 %v776, %v810
        %812 = vmatmul.f32.gmra.mxu0 %v676
        %v813 = vpop.f32.mrf.mxu0
        %v814 = vadd.f32 %v776, %v813
        %815 = vmatmul.f32.gmra.mxu0 %v679
        %v816 = vpop.f32.mrf.mxu0
        %v817 = vadd.f32 %v776, %v816
        %818 = vmatmul.f32.gmra.mxu0 %v682
        %v819 = vpop.f32.mrf.mxu0
        %v820 = vadd.f32 %v776, %v819
        %821 = vmatmul.f32.gmra.mxu0 %v685
        %v822 = vpop.f32.mrf.mxu0
        %v823 = vadd.f32 %v776, %v822
        %824 = vmatmul.f32.gmra.mxu0 %v688
        %v825 = vpop.f32.mrf.mxu0
        %v826 = vadd.f32 %v776, %v825
        %827 = vmatmul.f32.gmra.mxu0 %v691
        %v828 = vpop.f32.mrf.mxu0
        %v829 = vadd.f32 %v776, %v828
        %830 = vmatmul.f32.gmra.mxu0 %v694
        %v831 = vpop.f32.mrf.mxu0
        %v832 = vadd.f32 %v776, %v831
        %833 = vmatmul.f32.gmra.mxu0 %v697
        %v834 = vpop.f32.mrf.mxu0
        %v835 = vadd.f32 %v776, %v834
        %836 = vmatmul.f32.gmra.mxu0 %v700
        %v837 = vpop.f32.mrf.mxu0
        %v838 = vadd.f32 %v776, %v837
        %839 = vmatmul.f32.gmra.mxu0 %v703
        %v840 = vpop.f32.mrf.mxu0
        %v841 = vadd.f32 %v776, %v840
        %842 = vdwg.mxu0
        %v843 = vxor.u32 %v796, 2147483648
        %v844 = vxor.u32 %v799, 2147483648
        %v845 = vxor.u32 %v802, 2147483648
        %v846 = vxor.u32 %v805, 2147483648
        %v847 = vxor.u32 %v808, 2147483648
        %v848 = vxor.u32 %v811, 2147483648
        %v849 = vxor.u32 %v814, 2147483648
        %v850 = vxor.u32 %v817, 2147483648
        %v851 = vxor.u32 %v820, 2147483648
        %v852 = vxor.u32 %v823, 2147483648
        %v853 = vxor.u32 %v826, 2147483648
        %v854 = vxor.u32 %v829, 2147483648
        %v855 = vxor.u32 %v832, 2147483648
        %v856 = vxor.u32 %v835, 2147483648
        %v857 = vxor.u32 %v838, 2147483648
        %v858 = vxor.u32 %v841, 2147483648
        %v859 = vmul.f32 %v843, 1.442695
        %v860 = vpow.pop %v859
        %v861 = vmul.f32 %v844, 1.442695
        %v862 = vpow.pop %v861
        %v863 = vmul.f32 %v845, 1.442695
        %v864 = vpow.pop %v863
        %v865 = vmul.f32 %v846, 1.442695
        %v866 = vpow.pop %v865
        %v867 = vmul.f32 %v847, 1.442695
        %v868 = vpow.pop %v867
        %v869 = vmul.f32 %v848, 1.442695
        %v870 = vpow.pop %v869
        %v871 = vmul.f32 %v849, 1.442695
        %v872 = vpow.pop %v871
        %v873 = vmul.f32 %v850, 1.442695
        %v874 = vpow.pop %v873
        %v875 = vmul.f32 %v851, 1.442695
        %v876 = vpow.pop %v875
        %v877 = vmul.f32 %v852, 1.442695
        %v878 = vpow.pop %v877
        %v879 = vmul.f32 %v853, 1.442695
        %v880 = vpow.pop %v879
        %v881 = vmul.f32 %v854, 1.442695
        %v882 = vpow.pop %v881
        %v883 = vmul.f32 %v855, 1.442695
        %v884 = vpow.pop %v883
        %v885 = vmul.f32 %v856, 1.442695
        %v886 = vpow.pop %v885
        %v887 = vmul.f32 %v857, 1.442695
        %v888 = vpow.pop %v887
        %v889 = vmul.f32 %v858, 1.442695
        %v890 = vpow.pop %v889
        %v891 = vadd.f32 %v860, 1.0
        %v892 = vadd.f32 %v862, 1.0
        %v893 = vadd.f32 %v864, 1.0
        %v894 = vadd.f32 %v866, 1.0
        %v895 = vadd.f32 %v868, 1.0
        %v896 = vadd.f32 %v870, 1.0
        %v897 = vadd.f32 %v872, 1.0
        %v898 = vadd.f32 %v874, 1.0
        %v899 = vadd.f32 %v876, 1.0
        %v900 = vadd.f32 %v878, 1.0
        %v901 = vadd.f32 %v880, 1.0
        %v902 = vadd.f32 %v882, 1.0
        %v903 = vadd.f32 %v884, 1.0
        %v904 = vadd.f32 %v886, 1.0
        %v905 = vadd.f32 %v888, 1.0
        %v906 = vadd.f32 %v890, 1.0
        %v907 = vrcp.pop %v891
        %v908 = vmul.f32 %v891, %v907
        %v909 = vsub.f32 1.0, %v908
        %v910 = vmul.f32 %v907, %v909
        %v911 = vadd.f32 %v907, %v910
        %vm912 = vweird.f32 %v891
        %vm913 = vweird.f32 %v907
        %vm914 = vmor %vm912, %vm913
        %v915 = vsel %vm914, %v907, %v911
        %v916 = vand.u32 2147483647, %v891
        %vm917 = vcmp.eq.f32.partialorder %v916, 8.507059e+37
        %v918 = vand.u32 %v891, 2147483648
        %v919 = vor.u32 1.1754944e-38, %v918
        %v920 = vsel %vm917, %v919, %v915
        %v921 = vmul.f32 1.0, %v920
        %v922 = vrcp.pop %v892
        %v923 = vmul.f32 %v892, %v922
        %v924 = vsub.f32 1.0, %v923
        %v925 = vmul.f32 %v922, %v924
        %v926 = vadd.f32 %v922, %v925
        %vm927 = vweird.f32 %v892
        %vm928 = vweird.f32 %v922
        %vm929 = vmor %vm927, %vm928
        %v930 = vsel %vm929, %v922, %v926
        %v931 = vand.u32 2147483647, %v892
        %vm932 = vcmp.eq.f32.partialorder %v931, 8.507059e+37
        %v933 = vand.u32 %v892, 2147483648
        %v934 = vor.u32 1.1754944e-38, %v933
        %v935 = vsel %vm932, %v934, %v930
        %v936 = vmul.f32 1.0, %v935
        %v937 = vrcp.pop %v893
        %v938 = vmul.f32 %v893, %v937
        %v939 = vsub.f32 1.0, %v938
        %v940 = vmul.f32 %v937, %v939
        %v941 = vadd.f32 %v937, %v940
        %vm942 = vweird.f32 %v893
        %vm943 = vweird.f32 %v937
        %vm944 = vmor %vm942, %vm943
        %v945 = vsel %vm944, %v937, %v941
        %v946 = vand.u32 2147483647, %v893
        %vm947 = vcmp.eq.f32.partialorder %v946, 8.507059e+37
        %v948 = vand.u32 %v893, 2147483648
        %v949 = vor.u32 1.1754944e-38, %v948
        %v950 = vsel %vm947, %v949, %v945
        %v951 = vmul.f32 1.0, %v950
        %v952 = vrcp.pop %v894
        %v953 = vmul.f32 %v894, %v952
        %v954 = vsub.f32 1.0, %v953
        %v955 = vmul.f32 %v952, %v954
        %v956 = vadd.f32 %v952, %v955
        %vm957 = vweird.f32 %v894
        %vm958 = vweird.f32 %v952
        %vm959 = vmor %vm957, %vm958
        %v960 = vsel %vm959, %v952, %v956
        %v961 = vand.u32 2147483647, %v894
        %vm962 = vcmp.eq.f32.partialorder %v961, 8.507059e+37
        %v963 = vand.u32 %v894, 2147483648
        %v964 = vor.u32 1.1754944e-38, %v963
        %v965 = vsel %vm962, %v964, %v960
        %v966 = vmul.f32 1.0, %v965
        %v967 = vrcp.pop %v895
        %v968 = vmul.f32 %v895, %v967
        %v969 = vsub.f32 1.0, %v968
        %v970 = vmul.f32 %v967, %v969
        %v971 = vadd.f32 %v967, %v970
        %vm972 = vweird.f32 %v895
        %vm973 = vweird.f32 %v967
        %vm974 = vmor %vm972, %vm973
        %v975 = vsel %vm974, %v967, %v971
        %v976 = vand.u32 2147483647, %v895
        %vm977 = vcmp.eq.f32.partialorder %v976, 8.507059e+37
        %v978 = vand.u32 %v895, 2147483648
        %v979 = vor.u32 1.1754944e-38, %v978
        %v980 = vsel %vm977, %v979, %v975
        %v981 = vmul.f32 1.0, %v980
        %v982 = vrcp.pop %v896
        %v983 = vmul.f32 %v896, %v982
        %v984 = vsub.f32 1.0, %v983
        %v985 = vmul.f32 %v982, %v984
        %v986 = vadd.f32 %v982, %v985
        %vm987 = vweird.f32 %v896
        %vm988 = vweird.f32 %v982
        %vm989 = vmor %vm987, %vm988
        %v990 = vsel %vm989, %v982, %v986
        %v991 = vand.u32 2147483647, %v896
        %vm992 = vcmp.eq.f32.partialorder %v991, 8.507059e+37
        %v993 = vand.u32 %v896, 2147483648
        %v994 = vor.u32 1.1754944e-38, %v993
        %v995 = vsel %vm992, %v994, %v990
        %v996 = vmul.f32 1.0, %v995
        %v997 = vrcp.pop %v897
        %v998 = vmul.f32 %v897, %v997
        %v999 = vsub.f32 1.0, %v998
        %v1000 = vmul.f32 %v997, %v999
        %v1001 = vadd.f32 %v997, %v1000
        %vm1002 = vweird.f32 %v897
        %vm1003 = vweird.f32 %v997
        %vm1004 = vmor %vm1002, %vm1003
        %v1005 = vsel %vm1004, %v997, %v1001
        %v1006 = vand.u32 2147483647, %v897
        %vm1007 = vcmp.eq.f32.partialorder %v1006, 8.507059e+37
        %v1008 = vand.u32 %v897, 2147483648
        %v1009 = vor.u32 1.1754944e-38, %v1008
        %v1010 = vsel %vm1007, %v1009, %v1005
        %v1011 = vmul.f32 1.0, %v1010
        %v1012 = vrcp.pop %v898
        %v1013 = vmul.f32 %v898, %v1012
        %v1014 = vsub.f32 1.0, %v1013
        %v1015 = vmul.f32 %v1012, %v1014
        %v1016 = vadd.f32 %v1012, %v1015
        %vm1017 = vweird.f32 %v898
        %vm1018 = vweird.f32 %v1012
        %vm1019 = vmor %vm1017, %vm1018
        %v1020 = vsel %vm1019, %v1012, %v1016
        %v1021 = vand.u32 2147483647, %v898
        %vm1022 = vcmp.eq.f32.partialorder %v1021, 8.507059e+37
        %v1023 = vand.u32 %v898, 2147483648
        %v1024 = vor.u32 1.1754944e-38, %v1023
        %v1025 = vsel %vm1022, %v1024, %v1020
        %v1026 = vmul.f32 1.0, %v1025
        %v1027 = vrcp.pop %v899
        %v1028 = vmul.f32 %v899, %v1027
        %v1029 = vsub.f32 1.0, %v1028
        %v1030 = vmul.f32 %v1027, %v1029
        %v1031 = vadd.f32 %v1027, %v1030
        %vm1032 = vweird.f32 %v899
        %vm1033 = vweird.f32 %v1027
        %vm1034 = vmor %vm1032, %vm1033
        %v1035 = vsel %vm1034, %v1027, %v1031
        %v1036 = vand.u32 2147483647, %v899
        %vm1037 = vcmp.eq.f32.partialorder %v1036, 8.507059e+37
        %v1038 = vand.u32 %v899, 2147483648
        %v1039 = vor.u32 1.1754944e-38, %v1038
        %v1040 = vsel %vm1037, %v1039, %v1035
        %v1041 = vmul.f32 1.0, %v1040
        %v1042 = vrcp.pop %v900
        %v1043 = vmul.f32 %v900, %v1042
        %v1044 = vsub.f32 1.0, %v1043
        %v1045 = vmul.f32 %v1042, %v1044
        %v1046 = vadd.f32 %v1042, %v1045
        %vm1047 = vweird.f32 %v900
        %vm1048 = vweird.f32 %v1042
        %vm1049 = vmor %vm1047, %vm1048
        %v1050 = vsel %vm1049, %v1042, %v1046
        %v1051 = vand.u32 2147483647, %v900
        %vm1052 = vcmp.eq.f32.partialorder %v1051, 8.507059e+37
        %v1053 = vand.u32 %v900, 2147483648
        %v1054 = vor.u32 1.1754944e-38, %v1053
        %v1055 = vsel %vm1052, %v1054, %v1050
        %v1056 = vmul.f32 1.0, %v1055
        %v1057 = vrcp.pop %v901
        %v1058 = vmul.f32 %v901, %v1057
        %v1059 = vsub.f32 1.0, %v1058
        %v1060 = vmul.f32 %v1057, %v1059
        %v1061 = vadd.f32 %v1057, %v1060
        %vm1062 = vweird.f32 %v901
        %vm1063 = vweird.f32 %v1057
        %vm1064 = vmor %vm1062, %vm1063
        %v1065 = vsel %vm1064, %v1057, %v1061
        %v1066 = vand.u32 2147483647, %v901
        %vm1067 = vcmp.eq.f32.partialorder %v1066, 8.507059e+37
        %v1068 = vand.u32 %v901, 2147483648
        %v1069 = vor.u32 1.1754944e-38, %v1068
        %v1070 = vsel %vm1067, %v1069, %v1065
        %v1071 = vmul.f32 1.0, %v1070
        %v1072 = vrcp.pop %v902
        %v1073 = vmul.f32 %v902, %v1072
        %v1074 = vsub.f32 1.0, %v1073
        %v1075 = vmul.f32 %v1072, %v1074
        %v1076 = vadd.f32 %v1072, %v1075
        %vm1077 = vweird.f32 %v902
        %vm1078 = vweird.f32 %v1072
        %vm1079 = vmor %vm1077, %vm1078
        %v1080 = vsel %vm1079, %v1072, %v1076
        %v1081 = vand.u32 2147483647, %v902
        %vm1082 = vcmp.eq.f32.partialorder %v1081, 8.507059e+37
        %v1083 = vand.u32 %v902, 2147483648
        %v1084 = vor.u32 1.1754944e-38, %v1083
        %v1085 = vsel %vm1082, %v1084, %v1080
        %v1086 = vmul.f32 1.0, %v1085
        %v1087 = vrcp.pop %v903
        %v1088 = vmul.f32 %v903, %v1087
        %v1089 = vsub.f32 1.0, %v1088
        %v1090 = vmul.f32 %v1087, %v1089
        %v1091 = vadd.f32 %v1087, %v1090
        %vm1092 = vweird.f32 %v903
        %vm1093 = vweird.f32 %v1087
        %vm1094 = vmor %vm1092, %vm1093
        %v1095 = vsel %vm1094, %v1087, %v1091
        %v1096 = vand.u32 2147483647, %v903
        %vm1097 = vcmp.eq.f32.partialorder %v1096, 8.507059e+37
        %v1098 = vand.u32 %v903, 2147483648
        %v1099 = vor.u32 1.1754944e-38, %v1098
        %v1100 = vsel %vm1097, %v1099, %v1095
        %v1101 = vmul.f32 1.0, %v1100
        %v1102 = vrcp.pop %v904
        %v1103 = vmul.f32 %v904, %v1102
        %v1104 = vsub.f32 1.0, %v1103
        %v1105 = vmul.f32 %v1102, %v1104
        %v1106 = vadd.f32 %v1102, %v1105
        %vm1107 = vweird.f32 %v904
        %vm1108 = vweird.f32 %v1102
        %vm1109 = vmor %vm1107, %vm1108
        %v1110 = vsel %vm1109, %v1102, %v1106
        %v1111 = vand.u32 2147483647, %v904
        %vm1112 = vcmp.eq.f32.partialorder %v1111, 8.507059e+37
        %v1113 = vand.u32 %v904, 2147483648
        %v1114 = vor.u32 1.1754944e-38, %v1113
        %v1115 = vsel %vm1112, %v1114, %v1110
        %v1116 = vmul.f32 1.0, %v1115
        %v1117 = vrcp.pop %v905
        %v1118 = vmul.f32 %v905, %v1117
        %v1119 = vsub.f32 1.0, %v1118
        %v1120 = vmul.f32 %v1117, %v1119
        %v1121 = vadd.f32 %v1117, %v1120
        %vm1122 = vweird.f32 %v905
        %vm1123 = vweird.f32 %v1117
        %vm1124 = vmor %vm1122, %vm1123
        %v1125 = vsel %vm1124, %v1117, %v1121
        %v1126 = vand.u32 2147483647, %v905
        %vm1127 = vcmp.eq.f32.partialorder %v1126, 8.507059e+37
        %v1128 = vand.u32 %v905, 2147483648
        %v1129 = vor.u32 1.1754944e-38, %v1128
        %v1130 = vsel %vm1127, %v1129, %v1125
        %v1131 = vmul.f32 1.0, %v1130
        %v1132 = vrcp.pop %v906
        %v1133 = vmul.f32 %v906, %v1132
        %v1134 = vsub.f32 1.0, %v1133
        %v1135 = vmul.f32 %v1132, %v1134
        %v1136 = vadd.f32 %v1132, %v1135
        %vm1137 = vweird.f32 %v906
        %vm1138 = vweird.f32 %v1132
        %vm1139 = vmor %vm1137, %vm1138
        %v1140 = vsel %vm1139, %v1132, %v1136
        %v1141 = vand.u32 2147483647, %v906
        %vm1142 = vcmp.eq.f32.partialorder %v1141, 8.507059e+37
        %v1143 = vand.u32 %v906, 2147483648
        %v1144 = vor.u32 1.1754944e-38, %v1143
        %v1145 = vsel %vm1142, %v1144, %v1140
        %v1146 = vmul.f32 1.0, %v1145
        %v1147 = vmul.f32 %v921, %v394
        %v1148 = vmul.f32 %v936, %v395
        %v1149 = vmul.f32 %v951, %v396
        %v1150 = vmul.f32 %v966, %v397
        %v1151 = vmul.f32 %v981, %v398
        %v1152 = vmul.f32 %v996, %v399
        %v1153 = vmul.f32 %v1011, %v400
        %v1154 = vmul.f32 %v1026, %v401
        %v1155 = vmul.f32 %v1041, %v402
        %v1156 = vmul.f32 %v1056, %v403
        %v1157 = vmul.f32 %v1071, %v404
        %v1158 = vmul.f32 %v1086, %v405
        %v1159 = vmul.f32 %v1101, %v406
        %v1160 = vmul.f32 %v1116, %v407
        %v1161 = vmul.f32 %v1131, %v408
        %v1162 = vmul.f32 %v1146, %v409
        %v1163 = vsub.f32 1.0, %v921
        %v1164 = vsub.f32 1.0, %v936
        %v1165 = vsub.f32 1.0, %v951
        %v1166 = vsub.f32 1.0, %v966
        %v1167 = vsub.f32 1.0, %v981
        %v1168 = vsub.f32 1.0, %v996
        %v1169 = vsub.f32 1.0, %v1011
        %v1170 = vsub.f32 1.0, %v1026
        %v1171 = vsub.f32 1.0, %v1041
        %v1172 = vsub.f32 1.0, %v1056
        %v1173 = vsub.f32 1.0, %v1071
        %v1174 = vsub.f32 1.0, %v1086
        %v1175 = vsub.f32 1.0, %v1101
        %v1176 = vsub.f32 1.0, %v1116
        %v1177 = vsub.f32 1.0, %v1131
        %v1178 = vsub.f32 1.0, %v1146
        %v1179 = vmul.f32 %v1163, %v723
        %v1180 = vmul.f32 %v1164, %v726
        %v1181 = vmul.f32 %v1165, %v729
        %v1182 = vmul.f32 %v1166, %v732
        %v1183 = vmul.f32 %v1167, %v735
        %v1184 = vmul.f32 %v1168, %v738
        %v1185 = vmul.f32 %v1169, %v741
        %v1186 = vmul.f32 %v1170, %v744
        %v1187 = vmul.f32 %v1171, %v747
        %v1188 = vmul.f32 %v1172, %v750
        %v1189 = vmul.f32 %v1173, %v753
        %v1190 = vmul.f32 %v1174, %v756
        %v1191 = vmul.f32 %v1175, %v759
        %v1192 = vmul.f32 %v1176, %v762
        %v1193 = vmul.f32 %v1177, %v765
        %v1194 = vmul.f32 %v1178, %v768
        %v1195 = vadd.f32 %v1147, %v1179
        %v1196 = vadd.f32 %v1148, %v1180
        %v1197 = vadd.f32 %v1149, %v1181
        %v1198 = vadd.f32 %v1150, %v1182
        %v1199 = vadd.f32 %v1151, %v1183
        %v1200 = vadd.f32 %v1152, %v1184
        %v1201 = vadd.f32 %v1153, %v1185
        %v1202 = vadd.f32 %v1154, %v1186
        %v1203 = vadd.f32 %v1155, %v1187
        %v1204 = vadd.f32 %v1156, %v1188
        %v1205 = vadd.f32 %v1157, %v1189
        %v1206 = vadd.f32 %v1158, %v1190
        %v1207 = vadd.f32 %v1159, %v1191
        %v1208 = vadd.f32 %v1160, %v1192
        %v1209 = vadd.f32 %v1161, %v1193
        %v1210 = vadd.f32 %v1162, %v1194
        %1211 = vst [vmem:[%s383] sm:$0xff] %v1195
        %1212 = vst [vmem:[%s383 + $0x8] sm:$0xff] %v1196
        %1213 = vst [vmem:[%s383 + $0x10] sm:$0xff] %v1197
        %1214 = vst [vmem:[%s383 + $0x18] sm:$0xff] %v1198
        %1215 = vst [vmem:[%s383 + $0x20] sm:$0xff] %v1199
        %1216 = vst [vmem:[%s383 + $0x28] sm:$0xff] %v1200
        %1217 = vst [vmem:[%s383 + $0x30] sm:$0xff] %v1201
        %1218 = vst [vmem:[%s383 + $0x38] sm:$0xff] %v1202
        %1219 = vst [vmem:[%s383 + $0x40] sm:$0xff] %v1203
        %1220 = vst [vmem:[%s383 + $0x48] sm:$0xff] %v1204
        %1221 = vst [vmem:[%s383 + $0x50] sm:$0xff] %v1205
        %1222 = vst [vmem:[%s383 + $0x58] sm:$0xff] %v1206
        %1223 = vst [vmem:[%s383 + $0x60] sm:$0xff] %v1207
        %1224 = vst [vmem:[%s383 + $0x68] sm:$0xff] %v1208
        %1225 = vst [vmem:[%s383 + $0x70] sm:$0xff] %v1209
        %1226 = vst [vmem:[%s383 + $0x78] sm:$0xff] %v1210
        %v1227 = vsub.f32 0.0, %v796
        %v1228 = vsub.f32 0.0, %v799
        %v1229 = vsub.f32 0.0, %v802
        %v1230 = vsub.f32 0.0, %v805
        %v1231 = vsub.f32 0.0, %v808
        %v1232 = vsub.f32 0.0, %v811
        %v1233 = vsub.f32 0.0, %v814
        %v1234 = vsub.f32 0.0, %v817
        %v1235 = vsub.f32 0.0, %v820
        %v1236 = vsub.f32 0.0, %v823
        %v1237 = vsub.f32 0.0, %v826
        %v1238 = vsub.f32 0.0, %v829
        %v1239 = vsub.f32 0.0, %v832
        %v1240 = vsub.f32 0.0, %v835
        %v1241 = vsub.f32 0.0, %v838
        %v1242 = vsub.f32 0.0, %v841
        %v1243 = vmax.f32 %v1227, 0.0
        %v1244 = vmax.f32 %v1228, 0.0
        %v1245 = vmax.f32 %v1229, 0.0
        %v1246 = vmax.f32 %v1230, 0.0
        %v1247 = vmax.f32 %v1231, 0.0
        %v1248 = vmax.f32 %v1232, 0.0
        %v1249 = vmax.f32 %v1233, 0.0
        %v1250 = vmax.f32 %v1234, 0.0
        %v1251 = vmax.f32 %v1235, 0.0
        %v1252 = vmax.f32 %v1236, 0.0
        %v1253 = vmax.f32 %v1237, 0.0
        %v1254 = vmax.f32 %v1238, 0.0
        %v1255 = vmax.f32 %v1239, 0.0
        %v1256 = vmax.f32 %v1240, 0.0
        %v1257 = vmax.f32 %v1241, 0.0
        %v1258 = vmax.f32 %v1242, 0.0
        %v1259 = vsub.f32 0.0, %v1227
        %v1260 = vsub.f32 0.0, %v1228
        %v1261 = vsub.f32 0.0, %v1229
        %v1262 = vsub.f32 0.0, %v1230
        %v1263 = vsub.f32 0.0, %v1231
        %v1264 = vsub.f32 0.0, %v1232
        %v1265 = vsub.f32 0.0, %v1233
        %v1266 = vsub.f32 0.0, %v1234
        %v1267 = vsub.f32 0.0, %v1235
        %v1268 = vsub.f32 0.0, %v1236
        %v1269 = vsub.f32 0.0, %v1237
        %v1270 = vsub.f32 0.0, %v1238
        %v1271 = vsub.f32 0.0, %v1239
        %v1272 = vsub.f32 0.0, %v1240
        %v1273 = vsub.f32 0.0, %v1241
        %v1274 = vsub.f32 0.0, %v1242
        %vm1275 = vcmp.ne.f32.partialorder %v1259, %v1259
        %vm1276 = vcmp.ne.f32.partialorder %v1260, %v1260
        %vm1277 = vcmp.ne.f32.partialorder %v1261, %v1261
        %vm1278 = vcmp.ne.f32.partialorder %v1262, %v1262
        %vm1279 = vcmp.ne.f32.partialorder %v1263, %v1263
        %vm1280 = vcmp.ne.f32.partialorder %v1264, %v1264
        %vm1281 = vcmp.ne.f32.partialorder %v1265, %v1265
        %vm1282 = vcmp.ne.f32.partialorder %v1266, %v1266
        %vm1283 = vcmp.ne.f32.partialorder %v1267, %v1267
        %vm1284 = vcmp.ne.f32.partialorder %v1268, %v1268
        %vm1285 = vcmp.ne.f32.partialorder %v1269, %v1269
        %vm1286 = vcmp.ne.f32.partialorder %v1270, %v1270
        %vm1287 = vcmp.ne.f32.partialorder %v1271, %v1271
        %vm1288 = vcmp.ne.f32.partialorder %v1272, %v1272
        %vm1289 = vcmp.ne.f32.partialorder %v1273, %v1273
        %vm1290 = vcmp.ne.f32.partialorder %v1274, %v1274
        %v1291 = vadd.f32 %v1227, 0.0
        %v1292 = vadd.f32 %v1228, 0.0
        %v1293 = vadd.f32 %v1229, 0.0
        %v1294 = vadd.f32 %v1230, 0.0
        %v1295 = vadd.f32 %v1231, 0.0
        %v1296 = vadd.f32 %v1232, 0.0
        %v1297 = vadd.f32 %v1233, 0.0
        %v1298 = vadd.f32 %v1234, 0.0
        %v1299 = vadd.f32 %v1235, 0.0
        %v1300 = vadd.f32 %v1236, 0.0
        %v1301 = vadd.f32 %v1237, 0.0
        %v1302 = vadd.f32 %v1238, 0.0
        %v1303 = vadd.f32 %v1239, 0.0
        %v1304 = vadd.f32 %v1240, 0.0
        %v1305 = vadd.f32 %v1241, 0.0
        %v1306 = vadd.f32 %v1242, 0.0
        %v1307 = vand.u32 2147483647, %v1259
        %v1308 = vand.u32 2147483647, %v1260
        %v1309 = vand.u32 2147483647, %v1261
        %v1310 = vand.u32 2147483647, %v1262
        %v1311 = vand.u32 2147483647, %v1263
        %v1312 = vand.u32 2147483647, %v1264
        %v1313 = vand.u32 2147483647, %v1265
        %v1314 = vand.u32 2147483647, %v1266
        %v1315 = vand.u32 2147483647, %v1267
        %v1316 = vand.u32 2147483647, %v1268
        %v1317 = vand.u32 2147483647, %v1269
        %v1318 = vand.u32 2147483647, %v1270
        %v1319 = vand.u32 2147483647, %v1271
        %v1320 = vand.u32 2147483647, %v1272
        %v1321 = vand.u32 2147483647, %v1273
        %v1322 = vand.u32 2147483647, %v1274
        %v1323 = vsub.f32 0.0, %v1307
        %v1324 = vsub.f32 0.0, %v1308
        %v1325 = vsub.f32 0.0, %v1309
        %v1326 = vsub.f32 0.0, %v1310
        %v1327 = vsub.f32 0.0, %v1311
        %v1328 = vsub.f32 0.0, %v1312
        %v1329 = vsub.f32 0.0, %v1313
        %v1330 = vsub.f32 0.0, %v1314
        %v1331 = vsub.f32 0.0, %v1315
        %v1332 = vsub.f32 0.0, %v1316
        %v1333 = vsub.f32 0.0, %v1317
        %v1334 = vsub.f32 0.0, %v1318
        %v1335 = vsub.f32 0.0, %v1319
        %v1336 = vsub.f32 0.0, %v1320
        %v1337 = vsub.f32 0.0, %v1321
        %v1338 = vsub.f32 0.0, %v1322
        %v1339 = vmul.f32 %v1323, 1.442695
        %v1340 = vpow.pop %v1339
        %v1341 = vmul.f32 %v1324, 1.442695
        %v1342 = vpow.pop %v1341
        %v1343 = vmul.f32 %v1325, 1.442695
        %v1344 = vpow.pop %v1343
        %v1345 = vmul.f32 %v1326, 1.442695
        %v1346 = vpow.pop %v1345
        %v1347 = vmul.f32 %v1327, 1.442695
        %v1348 = vpow.pop %v1347
        %v1349 = vmul.f32 %v1328, 1.442695
        %v1350 = vpow.pop %v1349
        %v1351 = vmul.f32 %v1329, 1.442695
        %v1352 = vpow.pop %v1351
        %v1353 = vmul.f32 %v1330, 1.442695
        %v1354 = vpow.pop %v1353
        %v1355 = vmul.f32 %v1331, 1.442695
        %v1356 = vpow.pop %v1355
        %v1357 = vmul.f32 %v1332, 1.442695
        %v1358 = vpow.pop %v1357
        %v1359 = vmul.f32 %v1333, 1.442695
        %v1360 = vpow.pop %v1359
        %v1361 = vmul.f32 %v1334, 1.442695
        %v1362 = vpow.pop %v1361
        %v1363 = vmul.f32 %v1335, 1.442695
        %v1364 = vpow.pop %v1363
        %v1365 = vmul.f32 %v1336, 1.442695
        %v1366 = vpow.pop %v1365
        %v1367 = vmul.f32 %v1337, 1.442695
        %v1368 = vpow.pop %v1367
        %v1369 = vmul.f32 %v1338, 1.442695
        %v1370 = vpow.pop %v1369
        %v1371 = vadd.f32 %v1340, 1.0
        %v1372 = vlog2.pop %v1371
        %v1373 = vmul.f32 %v1372, 0.6931472
        %v1374 = vmul.f32 -0.5, %v1340
        %v1375 = vadd.f32 %v1374, 1.0
        %v1376 = vmul.f32 %v1375, %v1340
        %v1377 = vand.u32 2147483647, %v1340
        %vm1378 = vcmp.lt.f32.partialorder %v1377, 0.0004427343
        %v1379 = vsel %vm1378, %v1376, %v1373
        %v1380 = vadd.f32 %v1342, 1.0
        %v1381 = vlog2.pop %v1380
        %v1382 = vmul.f32 %v1381, 0.6931472
        %v1383 = vmul.f32 -0.5, %v1342
        %v1384 = vadd.f32 %v1383, 1.0
        %v1385 = vmul.f32 %v1384, %v1342
        %v1386 = vand.u32 2147483647, %v1342
        %vm1387 = vcmp.lt.f32.partialorder %v1386, 0.0004427343
        %v1388 = vsel %vm1387, %v1385, %v1382
        %v1389 = vadd.f32 %v1344, 1.0
        %v1390 = vlog2.pop %v1389
        %v1391 = vmul.f32 %v1390, 0.6931472
        %v1392 = vmul.f32 -0.5, %v1344
        %v1393 = vadd.f32 %v1392, 1.0
        %v1394 = vmul.f32 %v1393, %v1344
        %v1395 = vand.u32 2147483647, %v1344
        %vm1396 = vcmp.lt.f32.partialorder %v1395, 0.0004427343
        %v1397 = vsel %vm1396, %v1394, %v1391
        %v1398 = vadd.f32 %v1346, 1.0
        %v1399 = vlog2.pop %v1398
        %v1400 = vmul.f32 %v1399, 0.6931472
        %v1401 = vmul.f32 -0.5, %v1346
        %v1402 = vadd.f32 %v1401, 1.0
        %v1403 = vmul.f32 %v1402, %v1346
        %v1404 = vand.u32 2147483647, %v1346
        %vm1405 = vcmp.lt.f32.partialorder %v1404, 0.0004427343
        %v1406 = vsel %vm1405, %v1403, %v1400
        %v1407 = vadd.f32 %v1348, 1.0
        %v1408 = vlog2.pop %v1407
        %v1409 = vmul.f32 %v1408, 0.6931472
        %v1410 = vmul.f32 -0.5, %v1348
        %v1411 = vadd.f32 %v1410, 1.0
        %v1412 = vmul.f32 %v1411, %v1348
        %v1413 = vand.u32 2147483647, %v1348
        %vm1414 = vcmp.lt.f32.partialorder %v1413, 0.0004427343
        %v1415 = vsel %vm1414, %v1412, %v1409
        %v1416 = vadd.f32 %v1350, 1.0
        %v1417 = vlog2.pop %v1416
        %v1418 = vmul.f32 %v1417, 0.6931472
        %v1419 = vmul.f32 -0.5, %v1350
        %v1420 = vadd.f32 %v1419, 1.0
        %v1421 = vmul.f32 %v1420, %v1350
        %v1422 = vand.u32 2147483647, %v1350
        %vm1423 = vcmp.lt.f32.partialorder %v1422, 0.0004427343
        %v1424 = vsel %vm1423, %v1421, %v1418
        %v1425 = vadd.f32 %v1352, 1.0
        %v1426 = vlog2.pop %v1425
        %v1427 = vmul.f32 %v1426, 0.6931472
        %v1428 = vmul.f32 -0.5, %v1352
        %v1429 = vadd.f32 %v1428, 1.0
        %v1430 = vmul.f32 %v1429, %v1352
        %v1431 = vand.u32 2147483647, %v1352
        %vm1432 = vcmp.lt.f32.partialorder %v1431, 0.0004427343
        %v1433 = vsel %vm1432, %v1430, %v1427
        %v1434 = vadd.f32 %v1354, 1.0
        %v1435 = vlog2.pop %v1434
        %v1436 = vmul.f32 %v1435, 0.6931472
        %v1437 = vmul.f32 -0.5, %v1354
        %v1438 = vadd.f32 %v1437, 1.0
        %v1439 = vmul.f32 %v1438, %v1354
        %v1440 = vand.u32 2147483647, %v1354
        %vm1441 = vcmp.lt.f32.partialorder %v1440, 0.0004427343
        %v1442 = vsel %vm1441, %v1439, %v1436
        %v1443 = vadd.f32 %v1356, 1.0
        %v1444 = vlog2.pop %v1443
        %v1445 = vmul.f32 %v1444, 0.6931472
        %v1446 = vmul.f32 -0.5, %v1356
        %v1447 = vadd.f32 %v1446, 1.0
        %v1448 = vmul.f32 %v1447, %v1356
        %v1449 = vand.u32 2147483647, %v1356
        %vm1450 = vcmp.lt.f32.partialorder %v1449, 0.0004427343
        %v1451 = vsel %vm1450, %v1448, %v1445
        %v1452 = vadd.f32 %v1358, 1.0
        %v1453 = vlog2.pop %v1452
        %v1454 = vmul.f32 %v1453, 0.6931472
        %v1455 = vmul.f32 -0.5, %v1358
        %v1456 = vadd.f32 %v1455, 1.0
        %v1457 = vmul.f32 %v1456, %v1358
        %v1458 = vand.u32 2147483647, %v1358
        %vm1459 = vcmp.lt.f32.partialorder %v1458, 0.0004427343
        %v1460 = vsel %vm1459, %v1457, %v1454
        %v1461 = vadd.f32 %v1360, 1.0
        %v1462 = vlog2.pop %v1461
        %v1463 = vmul.f32 %v1462, 0.6931472
        %v1464 = vmul.f32 -0.5, %v1360
        %v1465 = vadd.f32 %v1464, 1.0
        %v1466 = vmul.f32 %v1465, %v1360
        %v1467 = vand.u32 2147483647, %v1360
        %vm1468 = vcmp.lt.f32.partialorder %v1467, 0.0004427343
        %v1469 = vsel %vm1468, %v1466, %v1463
        %v1470 = vadd.f32 %v1362, 1.0
        %v1471 = vlog2.pop %v1470
        %v1472 = vmul.f32 %v1471, 0.6931472
        %v1473 = vmul.f32 -0.5, %v1362
        %v1474 = vadd.f32 %v1473, 1.0
        %v1475 = vmul.f32 %v1474, %v1362
        %v1476 = vand.u32 2147483647, %v1362
        %vm1477 = vcmp.lt.f32.partialorder %v1476, 0.0004427343
        %v1478 = vsel %vm1477, %v1475, %v1472
        %v1479 = vadd.f32 %v1364, 1.0
        %v1480 = vlog2.pop %v1479
        %v1481 = vmul.f32 %v1480, 0.6931472
        %v1482 = vmul.f32 -0.5, %v1364
        %v1483 = vadd.f32 %v1482, 1.0
        %v1484 = vmul.f32 %v1483, %v1364
        %v1485 = vand.u32 2147483647, %v1364
        %vm1486 = vcmp.lt.f32.partialorder %v1485, 0.0004427343
        %v1487 = vsel %vm1486, %v1484, %v1481
        %v1488 = vadd.f32 %v1366, 1.0
        %v1489 = vlog2.pop %v1488
        %v1490 = vmul.f32 %v1489, 0.6931472
        %v1491 = vmul.f32 -0.5, %v1366
        %v1492 = vadd.f32 %v1491, 1.0
        %v1493 = vmul.f32 %v1492, %v1366
        %v1494 = vand.u32 2147483647, %v1366
        %vm1495 = vcmp.lt.f32.partialorder %v1494, 0.0004427343
        %v1496 = vsel %vm1495, %v1493, %v1490
        %v1497 = vadd.f32 %v1368, 1.0
        %v1498 = vlog2.pop %v1497
        %v1499 = vmul.f32 %v1498, 0.6931472
        %v1500 = vmul.f32 -0.5, %v1368
        %v1501 = vadd.f32 %v1500, 1.0
        %v1502 = vmul.f32 %v1501, %v1368
        %v1503 = vand.u32 2147483647, %v1368
        %vm1504 = vcmp.lt.f32.partialorder %v1503, 0.0004427343
        %v1505 = vsel %vm1504, %v1502, %v1499
        %v1506 = vadd.f32 %v1370, 1.0
        %v1507 = vlog2.pop %v1506
        %v1508 = vmul.f32 %v1507, 0.6931472
        %v1509 = vmul.f32 -0.5, %v1370
        %v1510 = vadd.f32 %v1509, 1.0
        %v1511 = vmul.f32 %v1510, %v1370
        %v1512 = vand.u32 2147483647, %v1370
        %vm1513 = vcmp.lt.f32.partialorder %v1512, 0.0004427343
        %v1514 = vsel %vm1513, %v1511, %v1508
        %v1515 = vadd.f32 %v1243, %v1379
        %v1516 = vadd.f32 %v1244, %v1388
        %v1517 = vadd.f32 %v1245, %v1397
        %v1518 = vadd.f32 %v1246, %v1406
        %v1519 = vadd.f32 %v1247, %v1415
        %v1520 = vadd.f32 %v1248, %v1424
        %v1521 = vadd.f32 %v1249, %v1433
        %v1522 = vadd.f32 %v1250, %v1442
        %v1523 = vadd.f32 %v1251, %v1451
        %v1524 = vadd.f32 %v1252, %v1460
        %v1525 = vadd.f32 %v1253, %v1469
        %v1526 = vadd.f32 %v1254, %v1478
        %v1527 = vadd.f32 %v1255, %v1487
        %v1528 = vadd.f32 %v1256, %v1496
        %v1529 = vadd.f32 %v1257, %v1505
        %v1530 = vadd.f32 %v1258, %v1514
        %v1531 = vsel %vm1275, %v1291, %v1515
        %v1532 = vsel %vm1276, %v1292, %v1516
        %v1533 = vsel %vm1277, %v1293, %v1517
        %v1534 = vsel %vm1278, %v1294, %v1518
        %v1535 = vsel %vm1279, %v1295, %v1519
        %v1536 = vsel %vm1280, %v1296, %v1520
        %v1537 = vsel %vm1281, %v1297, %v1521
        %v1538 = vsel %vm1282, %v1298, %v1522
        %v1539 = vsel %vm1283, %v1299, %v1523
        %v1540 = vsel %vm1284, %v1300, %v1524
        %v1541 = vsel %vm1285, %v1301, %v1525
        %v1542 = vsel %vm1286, %v1302, %v1526
        %v1543 = vsel %vm1287, %v1303, %v1527
        %v1544 = vsel %vm1288, %v1304, %v1528
        %v1545 = vsel %vm1289, %v1305, %v1529
        %v1546 = vsel %vm1290, %v1306, %v1530
        %1547 = vst [vmem:[%s390] sm:$0xff] %v1531
        %1548 = vst [vmem:[%s390 + $0x8] sm:$0xff] %v1532
        %1549 = vst [vmem:[%s390 + $0x10] sm:$0xff] %v1533
        %1550 = vst [vmem:[%s390 + $0x18] sm:$0xff] %v1534
        %1551 = vst [vmem:[%s390 + $0x20] sm:$0xff] %v1535
        %1552 = vst [vmem:[%s390 + $0x28] sm:$0xff] %v1536
        %1553 = vst [vmem:[%s390 + $0x30] sm:$0xff] %v1537
        %1554 = vst [vmem:[%s390 + $0x38] sm:$0xff] %v1538
        %1555 = vst [vmem:[%s390 + $0x40] sm:$0xff] %v1539
        %1556 = vst [vmem:[%s390 + $0x48] sm:$0xff] %v1540
        %1557 = vst [vmem:[%s390 + $0x50] sm:$0xff] %v1541
        %1558 = vst [vmem:[%s390 + $0x58] sm:$0xff] %v1542
        %1559 = vst [vmem:[%s390 + $0x60] sm:$0xff] %v1543
        %1560 = vst [vmem:[%s390 + $0x68] sm:$0xff] %v1544
        %1561 = vst [vmem:[%s390 + $0x70] sm:$0xff] %v1545
        %1562 = vst [vmem:[%s390 + $0x78] sm:$0xff] %v1546
        %s1563 = sand.u32 %s233, 1
        %s1564 = scalar_lea.sflag [#allocation4], %s1563
        %s1565 = sand.u32 %s233, 1
        %s1566 = smul.addr %s1565, 128
        %s1567 = scalar_lea.vmem [#allocation5], %s1566
        %s1568 = sand.u32 %s259, 1
        %s1569 = scalar_lea.sflag [#allocation7], %s1568
        %s1570 = sand.u32 %s259, 1
        %s1571 = smul.addr %s1570, 128
        %s1572 = scalar_lea.vmem [#allocation6], %s1571
        // Predicated region
        $region61: #{tpu_custom_call.1} parent=55 // pred_check
          %p1573 = pneg %p243
        $region62: #{tpu_custom_call.1} parent=55 // pred_check_branch
          %1575 = sbr.rel (%p1573) target = $region64
        $region63: #{tpu_custom_call.1} parent=55 // pred_region
          %s1576 = smul.u32 16, %s31
          %1578 = vsyncadd %s1564, 0
          %s1579 = smul.addr %s1576, 8
          %s1580 = scalar_lea.hbm %s9, %s1579
          %s1581 = sshll.u32 %s1567, 4
          %s1582 = int_to_ptr.vmem [resolvable:$true] %s1581
          %s1583 = sshll.u32 %s1580, 4
          %s1584 = int_to_ptr.hbm [resolvable:$true] %s1583
          %1589 = dma.vmem_to_hbm [thread:$0]  %s1582, 2048, %s1584, %s1564, 128, 128, 8
        $region64: #{tpu_custom_call.1} parent=55 // pred_fallthru
          _
        // Predicated region
        $region65: #{tpu_custom_call.1} parent=55 // pred_check
          %p1590 = pneg %p269
        $region66: #{tpu_custom_call.1} parent=55 // pred_check_branch
          %1592 = sbr.rel (%p1590) target = $region68
        $region67: #{tpu_custom_call.1} parent=55 // pred_region
          %s1593 = smul.u32 16, %s31
          %1595 = vsyncadd %s1569, 0
          %s1596 = smul.addr %s1593, 8
          %s1597 = scalar_lea.hbm %s10, %s1596
          %s1598 = sshll.u32 %s1572, 4
          %s1599 = int_to_ptr.vmem [resolvable:$true] %s1598
          %s1600 = sshll.u32 %s1597, 4
          %s1601 = int_to_ptr.hbm [resolvable:$true] %s1600
          %1606 = dma.vmem_to_hbm [thread:$0]  %s1599, 2048, %s1601, %s1569, 128, 128, 8
        $region68: #{tpu_custom_call.1} parent=55 // pred_fallthru
          _
      $region56: #{tpu_custom_call.1} parent=5 // pred_fallthru
        _
      %p1607 = scmp.le.s32.totalorder 2, %s26
      // Predicated region
      $region69: #{tpu_custom_call.1} parent=5 // pred_check
        %p1608 = pneg %p1607
      $region70: #{tpu_custom_call.1} parent=5 // pred_check_branch
        %1610 = sbr.rel (%p1608) target = $region72
      $region71: #{tpu_custom_call.1} parent=5 // pred_region
        %s1611 = ssub.s32 %s26, 2
        // Predicated region
        $region73: #{tpu_custom_call.1} parent=71 // pred_check
          %p1612 = pneg %p249
        $region74: #{tpu_custom_call.1} parent=71 // pred_check_branch
          %1614 = sbr.rel (%p1612) target = $region76
        $region75: #{tpu_custom_call.1} parent=71 // pred_region
          %s1615 = sand.u32 %s234, 1
          %s1616 = scalar_lea.sflag [#allocation4], %s1615
          %s1617 = sand.u32 %s234, 1
          %s1618 = smul.addr %s1617, 128
          %s1619 = scalar_lea.vmem [#allocation5], %s1618
          %1621 = dma.done %s1616, 2048
        $region76: #{tpu_custom_call.1} parent=71 // pred_fallthru
          _
        // Predicated region
        $region77: #{tpu_custom_call.1} parent=71 // pred_check
          %p1622 = pneg %p275
        $region78: #{tpu_custom_call.1} parent=71 // pred_check_branch
          %1624 = sbr.rel (%p1622) target = $region80
        $region79: #{tpu_custom_call.1} parent=71 // pred_region
          %s1625 = sand.u32 %s260, 1
          %s1626 = scalar_lea.sflag [#allocation7], %s1625
          %s1627 = sand.u32 %s260, 1
          %s1628 = smul.addr %s1627, 128
          %s1629 = scalar_lea.vmem [#allocation6], %s1628
          %1631 = dma.done %s1626, 2048
        $region80: #{tpu_custom_call.1} parent=71 // pred_fallthru
          _
      $region72: #{tpu_custom_call.1} parent=5 // pred_fallthru
        _
    $region6: #{tpu_custom_call.1} parent=1 // loop_footer
      %s30 = sadd.s32 1, %s26
    $region7: #{tpu_custom_call.1} parent=1 // loop_footer_branch
      %25 = sbr.rel target = $region3
    $region8: #{tpu_custom_call.1} parent=1 // loop_exit
      _
    %1632 = vsyncpa [#allocation3], 1
    %s1633 = scalar_lea.sflag [#allocation3], 1
    %1634 = vsyncpa %s1633, 1
    %1635 = vsyncpa [#allocation4], 1
    %s1636 = scalar_lea.sflag [#allocation4], 1
    %1637 = vsyncpa %s1636, 1
    %1638 = vsyncpa [#allocation7], 1
    %s1639 = scalar_lea.sflag [#allocation7], 1
    %1640 = vsyncpa %s1639, 1

</llo_original>
